<compile_context>
chip_gen: v6e
topology: v6e:2x2x1
jax: 0.10.0
libtpu: 0.0.40
codegen_flags: <defaults>
</compile_context>

<pallas_src>
import jax
import jax.numpy as jnp
import numpy as np
from jax.experimental import pallas as pl
from jax.experimental.pallas import tpu as pltpu

EPS = 1e-5


def _mish(x):
    # x * tanh(softplus(x)) == x * n / (n + 2) with n = t*(t+2), t = exp(x).
    # One EUP op (exp) + one divide instead of exp+log+tanh.  Clamping at 20 is exact in
    # f32 (tanh(softplus(20)) == 1 to f32 precision) and avoids overflow.
    t = jnp.exp(jnp.minimum(x, 20.0))
    n = t * (t + 2.0)
    return x * (n / (n + 2.0))


def _relu(x):
    return jnp.maximum(x, 0.0)


def _fold_bn(w, bn):
    """Fold inference-mode BatchNorm (gamma, beta, mean, var) into conv weight/bias."""
    gamma, beta, mean, var = bn
    scale = gamma / jnp.sqrt(var + EPS)
    w_f = w * scale.reshape((-1,) + (1,) * (w.ndim - 1))
    b_f = beta - mean * scale
    return w_f.astype(jnp.float32), b_f.astype(jnp.float32)


# ---------------------------------------------------------------------------
# Fused kernel: expand (MXU) + depthwise conv (VPU, whole-tile) + SE + project (MXU)
# + optional residual, per batch element, everything resident in VMEM.
# ---------------------------------------------------------------------------
def _make_fused_kernel(*, has_expand, use_se, use_res, exp_ch, oup, k, H, W, Wp,
                       L2, j_min, nl, mxu_bf16):
    act = _mish if nl == 'HS' else _relu
    prec = None if mxu_bf16 else jax.lax.Precision.HIGHEST
    cast = (lambda a: a.astype(jnp.bfloat16)) if mxu_bf16 else (lambda a: a)
    pad = k // 2
    inv_hw = 1.0 / float(H * W)

    def kernel(*refs):
        it = iter(refs)
        x_ref = next(it)                                   # (inp, Npe) padded, flattened
        int_mask_ref = next(it) if has_expand else None    # (1, Npe) interior mask
        core_mask_ref = next(it)                           # (1, L2) interior-column mask
        if has_expand:
            w_exp_ref, b_exp_ref = next(it), next(it)
        w_dw_ref, b_dw_ref = next(it), next(it)
        if use_se:
            w1t_ref, b1_ref, w2_ref, b2_ref = next(it), next(it), next(it), next(it)
        w_p_ref, b_p_ref = next(it), next(it)
        o_ref = next(it)
        y_scr = next(it) if has_expand else None           # (exp_ch, Npe) VMEM scratch

        # ---- expand: 1x1 conv (+folded BN) + act as one lane-dense MXU matmul.  The halo
        #      lanes are re-zeroed so the depthwise taps below see true zero padding.
        if has_expand:
            h = jnp.dot(w_exp_ref[...], cast(x_ref[...]),
                        preferred_element_type=jnp.float32, precision=prec)
            y_scr[...] = act(h + b_exp_ref[...]) * int_mask_ref[...]
            src = y_scr
        else:
            src = x_ref            # already zero in the halo (padded in the wrapper)

        # ---- depthwise kxk conv (+folded BN) + act: k*k whole-tile FMAs; every tap is a
        #      static, contiguous lane slice of the padded activation (no gather/roll).
        acc = jnp.zeros((exp_ch, L2), jnp.float32)
        for dy in range(k):
            for dx in range(k):
                start = j_min + (dy - pad) * Wp + (dx - pad)
                w_tap = w_dw_ref[:, dy * k + dx:dy * k + dx + 1]        # (exp_ch, 1)
                acc = acc + w_tap * src[:, start:start + L2]
        y = act(acc + b_dw_ref[...]) * core_mask_ref[...]               # zero halo columns

        # ---- squeeze-and-excitation: lane reduction + whole-tile FCs + HSigmoid gate.
        if use_se:
            sq = jnp.sum(y, axis=-1, keepdims=True) * inv_hw                      # (C, 1)
            h1 = jnp.sum(w1t_ref[...] * sq, axis=0, keepdims=True) + b1_ref[...]  # (1, Cr)
            h1 = jnp.maximum(h1, 0.0)
            ex = jnp.sum(w2_ref[...] * h1, axis=-1, keepdims=True) + b2_ref[...]  # (C, 1)
            gate = jnp.clip(ex + 3.0, 0.0, 6.0) * (1.0 / 6.0)                     # HSigmoid
            y = y * gate

        # ---- 1x1 projection (+folded BN) on the MXU, residual, lane-dense store.
        out = jnp.dot(w_p_ref[...], cast(y),
                      preferred_element_type=jnp.float32, precision=prec)
        out = out + b_p_ref[...]
        if use_res:
            out = out + x_ref[:, j_min:j_min + L2]
        o_ref[...] = out

    return kernel


def inverted_residual(x, params, *, k, s, use_se, nl, mxu_bf16=True):
    """Pallas TPU implementation of InvertedResidual.forward (eval-mode BN folded)."""
    B, inp, H, W = x.shape
    if s != 1:
        # TODO(synk): stride > 1 needs a strided-gather depthwise tap path (not needed here).
        raise NotImplementedError("stride > 1 not implemented in the fused Pallas kernel")
    assert k % 2 == 1, "odd depthwise kernel expected"

    w_dw = jnp.asarray(params['w_dw'])
    exp_ch = w_dw.shape[0]
    oup = params['w_proj'].shape[0]
    has_expand = exp_ch != inp
    use_res = (s == 1) and (inp == oup)
    cr = params['w_se1'].shape[0] if use_se else 0

    pad = k // 2
    Hp, Wp = H + 2 * pad, W + 2 * pad
    Npe = (Hp + 1) * Wp        # one extra padded row gives every tap slice headroom
    L2 = H * Wp                # lane-dense working width of the conv / output slab
    j_min = pad * Wp + pad     # flat offset of image pixel (0, 0) in the padded grid
    mm_dtype = jnp.bfloat16 if mxu_bf16 else jnp.float32

    # Zero-pad the (small, inp-channel) input once and flatten spatially: every in-kernel
    # tensor then lives on a lane-dense (channels, lanes) layout.
    x32 = x.astype(jnp.float32)
    xflat = jnp.pad(x32, ((0, 0), (0, 0), (pad, pad + 1), (pad, pad))).reshape(B, inp, Npe)

    # Static 0/1 masks (functions of H, W, k only), built host-side -> plain VMEM inputs.
    jj = np.arange(Npe)
    int_mask = (((jj // Wp) >= pad) & ((jj // Wp) < pad + H) &
                ((jj % Wp) >= pad) & ((jj % Wp) < pad + W)).astype(np.float32)[None, :]
    core_mask = ((np.arange(L2) % Wp) < W).astype(np.float32)[None, :]

    in_specs, args = [], []

    def add(arr, spec):
        in_specs.append(spec)
        args.append(arr)

    def add_const(arr):
        arr = jnp.asarray(arr)
        add(arr, pl.BlockSpec(arr.shape, lambda b: (0, 0)))   # resident across grid steps

    add(xflat, pl.BlockSpec((pl.Squeezed(), inp, Npe), lambda b: (b, 0, 0)))
    if has_expand:
        add_const(int_mask)
    add_const(core_mask)

    if has_expand:
        w_exp_f, b_exp_f = _fold_bn(jnp.asarray(params['w_exp']), params['bn1'])
        add_const(w_exp_f.astype(mm_dtype))                    # (exp_ch, inp)
        add_const(b_exp_f.reshape(exp_ch, 1))
    w_dw_f, b_dw_f = _fold_bn(w_dw.reshape(exp_ch, k * k), params['bn2'])
    add_const(w_dw_f)                                          # (exp_ch, k*k)  VMEM
    add_const(b_dw_f.reshape(exp_ch, 1))
    if use_se:
        add_const(jnp.asarray(params['w_se1'], jnp.float32).T)              # (exp_ch, cr)
        add_const(jnp.asarray(params['b_se1'], jnp.float32).reshape(1, cr))
        add_const(jnp.asarray(params['w_se2'], jnp.float32))                # (exp_ch, cr)
        add_const(jnp.asarray(params['b_se2'], jnp.float32).reshape(exp_ch, 1))
    w_p_f, b_p_f = _fold_bn(jnp.asarray(params['w_proj']), params['bn3'])
    add_const(w_p_f.astype(mm_dtype))                          # (oup, exp_ch)
    add_const(b_p_f.reshape(oup, 1))

    kernel = _make_fused_kernel(
        has_expand=has_expand, use_se=use_se, use_res=use_res, exp_ch=exp_ch, oup=oup,
        k=k, H=H, W=W, Wp=Wp, L2=L2, j_min=j_min, nl=nl, mxu_bf16=mxu_bf16)

    flops = 2 * B * L2 * ((exp_ch * inp if has_expand else 0) + exp_ch * k * k
                          + oup * exp_ch + (4 * exp_ch if use_se else 0))
    out = pl.pallas_call(
        kernel,
        out_shape=jax.ShapeDtypeStruct((B, oup, L2), jnp.float32),
        grid_spec=pltpu.PrefetchScalarGridSpec(
            num_scalar_prefetch=0,
            # One image per grid step (per-step tile already scales with exp_ch * H*W for
            # real shapes; for very large expansions add a channel-tile axis here).
            grid=(B,),
            in_specs=in_specs,
            out_specs=pl.BlockSpec((pl.Squeezed(), oup, L2), lambda b: (b, 0, 0)),
            scratch_shapes=([pltpu.VMEM((exp_ch, Npe), jnp.float32)] if has_expand else []),
        ),
        compiler_params=pltpu.CompilerParams(
            dimension_semantics=("parallel",),
            vmem_limit_bytes=48 * 1024 * 1024),
        cost_estimate=pl.CostEstimate(
            flops=int(flops),
            transcendentals=int(B * exp_ch * (Npe + L2)) if nl == 'HS' else 0,
            bytes_accessed=int(4 * (B * inp * Npe + B * oup * L2
                                    + exp_ch * (inp + oup + k * k + 2 * cr)))),
    )(*args)

    # Drop the inter-row halo lanes (one cheap XLA slice on the small output tensor).
    return out.reshape(B, oup, H, Wp)[:, :, :, :W]


# ---------------------------------------------------------------------------
# Pure-JAX reference mirroring the PyTorch InvertedResidual forward (eval-mode BN).
# ---------------------------------------------------------------------------
def _bn_ref(x, bn):
    gamma, beta, mean, var = bn
    inv = gamma / jnp.sqrt(var + EPS)
    return (x - mean[None, :, None, None]) * inv[None, :, None, None] \
        + beta[None, :, None, None]


def _conv1x1_ref(x, w, b=None):
    y = jnp.einsum('bchw,oc->bohw', x, w, precision=jax.lax.Precision.HIGHEST)
    if b is not None:
        y = y + b[None, :, None, None]
    return y


def inverted_residual_ref(x, params, *, k, s, use_se, nl):
    B, inp, H, W = x.shape
    exp_ch = params['w_dw'].shape[0]
    oup = params['w_proj'].shape[0]
    use_res = (s == 1) and (inp == oup)
    pad = k // 2
    act = (lambda v: v * jnp.tanh(jax.nn.softplus(v))) if nl == 'HS' else \
          (lambda v: jnp.maximum(v, 0.0))

    y = x
    if exp_ch != inp:
        y = act(_bn_ref(_conv1x1_ref(y, params['w_exp']), params['bn1']))
    y = jax.lax.conv_general_dilated(
        y, params['w_dw'].reshape(exp_ch, 1, k, k),
        window_strides=(s, s), padding=[(pad, pad), (pad, pad)],
        dimension_numbers=('NCHW', 'OIHW', 'NCHW'),
        feature_group_count=exp_ch,
        precision=jax.lax.Precision.HIGHEST)
    y = act(_bn_ref(y, params['bn2']))
    if use_se:
        t = jnp.mean(y, axis=(2, 3), keepdims=True)
        t = jnp.maximum(_conv1x1_ref(t, params['w_se1'], params['b_se1']), 0.0)
        t = _conv1x1_ref(t, params['w_se2'], params['b_se2'])
        t = jnp.clip(t + 3.0, 0.0, 6.0) / 6.0
        y = y * t
    y = _bn_ref(_conv1x1_ref(y, params['w_proj']), params['bn3'])
    return x + y if use_res else y


if __name__ == "__main__":
    # Config A: exercises every branch -- expand present (inp != exp), k=3, s=1, SE on,
    # Mish ('HS'), residual (inp == oup, s == 1).  B=4 so each v7x TensorCore gets >= 2
    # grid steps and input DMA can double-buffer.
    B, inp, exp_ch, oup = 4, 4, 8, 4
    H = W = 16
    k, s = 3, 1
    use_se, nl = True, 'HS'
    cr = exp_ch // 4

    keys = jax.random.split(jax.random.PRNGKey(0), 20)
    x = jax.random.normal(keys[0], (B, inp, H, W), dtype=jnp.float32)

    def bn_params(i, ch):
        return (jax.random.uniform(keys[i], (ch,), minval=0.5, maxval=1.5),      # gamma
                jax.random.normal(keys[i + 1], (ch,)) * 0.1,                     # beta
                jax.random.normal(keys[i + 2], (ch,)) * 0.1,                     # running mean
                jax.random.uniform(keys[i + 3], (ch,), minval=0.5, maxval=1.5))  # running var

    params = {
        'w_exp':  jax.random.normal(keys[1], (exp_ch, inp)) * 0.5,
        'bn1':    bn_params(2, exp_ch),
        'w_dw':   jax.random.normal(keys[6], (exp_ch, k, k)) * 0.3,
        'bn2':    bn_params(7, exp_ch),
        'w_se1':  jax.random.normal(keys[11], (cr, exp_ch)) * 0.5,
        'b_se1':  jax.random.normal(keys[12], (cr,)) * 0.1,
        'w_se2':  jax.random.normal(keys[13], (exp_ch, cr)) * 0.5,
        'b_se2':  jax.random.normal(keys[14], (exp_ch,)) * 0.1,
        'w_proj': jax.random.normal(keys[15], (oup, exp_ch)) * 0.3,
        'bn3':    bn_params(16, oup),
    }

    ref = inverted_residual_ref(x, params, k=k, s=s, use_se=use_se, nl=nl)

    # Exact-precision path (f32 MXU emulation): strict numerical check vs the reference.
    out_exact = jax.block_until_ready(
        inverted_residual(x, params, k=k, s=s, use_se=use_se, nl=nl, mxu_bf16=False))
    assert out_exact.shape == (B, oup, H, W), out_exact.shape
    err = float(jnp.max(jnp.abs(out_exact - ref)))
    assert jnp.allclose(out_exact, ref, atol=1e-3, rtol=1e-3), f"max abs err {err}"

    # Default fast path (single-pass bf16 MXU operands, f32 accumulation): the difference
    # vs the f32 reference is pure bf16 input rounding on random, unnormalized weights, so
    # this is a sanity bound (strict equivalence is asserted on the f32 path above).
    out_fast = jax.block_until_ready(
        inverted_residual(x, params, k=k, s=s, use_se=use_se, nl=nl))
    d = jnp.abs(out_fast - ref)
    assert float(jnp.mean(d)) < 2e-2 and float(jnp.max(d)) < 2.5e-1, \
        f"bf16 path err mean={float(jnp.mean(d))} max={float(jnp.max(d))}"

    # Config B: no expand (exp == inp -> Identity), no SE, ReLU, k=5, no residual
    # (oup != inp) -- covers the remaining branches of the module.
    B2, inp2, oup2, k2 = 2, 8, 16, 5
    keys2 = jax.random.split(jax.random.PRNGKey(1), 12)
    x2 = jax.random.normal(keys2[0], (B2, inp2, H, W), dtype=jnp.float32)

    def bn_params2(i, ch):
        return (jax.random.uniform(keys2[i], (ch,), minval=0.5, maxval=1.5),
                jax.random.normal(keys2[i + 1], (ch,)) * 0.1,
                jax.random.normal(keys2[i + 2], (ch,)) * 0.1,
                jax.random.uniform(keys2[i + 3], (ch,), minval=0.5, maxval=1.5))

    params2 = {
        'w_dw':   jax.random.normal(keys2[1], (inp2, k2, k2)) * 0.2,
        'bn2':    bn_params2(2, inp2),
        'w_proj': jax.random.normal(keys2[6], (oup2, inp2)) * 0.3,
        'bn3':    bn_params2(7, oup2),
    }
    ref2 = inverted_residual_ref(x2, params2, k=k2, s=1, use_se=False, nl='RE')
    out2 = jax.block_until_ready(
        inverted_residual(x2, params2, k=k2, s=1, use_se=False, nl='RE', mxu_bf16=False))
    assert out2.shape == (B2, oup2, H, W), out2.shape
    err2 = float(jnp.max(jnp.abs(out2 - ref2)))
    assert jnp.allclose(out2, ref2, atol=1e-3, rtol=1e-3), f"max abs err {err2}"

    print("KERNEL_OK")
</pallas_src>

<mosaic_0001>
module attributes {stable_mosaic.version = 11 : i64} {
  func.func @kernel(%arg0: i32, %arg1: memref<1x4x342xf32, #tpu.memory_space<vmem>>, %arg2: memref<1x342xf32, #tpu.memory_space<vmem>>, %arg3: memref<1x288xf32, #tpu.memory_space<vmem>>, %arg4: memref<8x4xf32, #tpu.memory_space<vmem>>, %arg5: memref<8x1xf32, #tpu.memory_space<vmem>>, %arg6: memref<8x9xf32, #tpu.memory_space<vmem>>, %arg7: memref<8x1xf32, #tpu.memory_space<vmem>>, %arg8: memref<8x2xf32, #tpu.memory_space<vmem>>, %arg9: memref<1x2xf32, #tpu.memory_space<vmem>>, %arg10: memref<8x2xf32, #tpu.memory_space<vmem>>, %arg11: memref<8x1xf32, #tpu.memory_space<vmem>>, %arg12: memref<4x8xf32, #tpu.memory_space<vmem>>, %arg13: memref<4x1xf32, #tpu.memory_space<vmem>>, %arg14: memref<1x4x288xf32, #tpu.memory_space<vmem>>, %arg15: memref<8x342xf32, #tpu.memory_space<vmem>>) attributes {dimension_semantics = [#tpu.dimension_semantics<parallel>], iteration_bounds = array<i64: 4>, scalar_prefetch = 0 : i64, scratch_operands = 1 : i64, tpu.core_type = #tpu.core_type<tc>, window_params = [{transform_indices = @transform_0, window_bounds = array<i64: 1, 4, 342>}, {pipeline_mode = #tpu.pipeline_mode<synchronous>, transform_indices = @transform_1, window_bounds = array<i64: 1, 342>}, {pipeline_mode = #tpu.pipeline_mode<synchronous>, transform_indices = @transform_2, window_bounds = array<i64: 1, 288>}, {pipeline_mode = #tpu.pipeline_mode<synchronous>, transform_indices = @transform_3, window_bounds = array<i64: 8, 4>}, {pipeline_mode = #tpu.pipeline_mode<synchronous>, transform_indices = @transform_4, window_bounds = array<i64: 8, 1>}, {pipeline_mode = #tpu.pipeline_mode<synchronous>, transform_indices = @transform_5, window_bounds = array<i64: 8, 9>}, {pipeline_mode = #tpu.pipeline_mode<synchronous>, transform_indices = @transform_6, window_bounds = array<i64: 8, 1>}, {pipeline_mode = #tpu.pipeline_mode<synchronous>, transform_indices = @transform_7, window_bounds = array<i64: 8, 2>}, {pipeline_mode = #tpu.pipeline_mode<synchronous>, transform_indices = @transform_8, window_bounds = array<i64: 1, 2>}, {pipeline_mode = #tpu.pipeline_mode<synchronous>, transform_indices = @transform_9, window_bounds = array<i64: 8, 2>}, {pipeline_mode = #tpu.pipeline_mode<synchronous>, transform_indices = @transform_10, window_bounds = array<i64: 8, 1>}, {pipeline_mode = #tpu.pipeline_mode<synchronous>, transform_indices = @transform_11, window_bounds = array<i64: 4, 8>}, {pipeline_mode = #tpu.pipeline_mode<synchronous>, transform_indices = @transform_12, window_bounds = array<i64: 4, 1>}, {transform_indices = @transform_13, window_bounds = array<i64: 1, 4, 288>}]} {
    %c0 = arith.constant 0 : index
    %c0_0 = arith.constant 0 : index
    %0 = vector.load %arg4[%c0, %c0_0] : memref<8x4xf32, #tpu.memory_space<vmem>>, vector<8x4xf32>
    %c0_1 = arith.constant 0 : index
    %c0_2 = arith.constant 0 : index
    %c0_3 = arith.constant 0 : index
    %1 = vector.load %arg1[%c0_1, %c0_2, %c0_3] : memref<1x4x342xf32, #tpu.memory_space<vmem>>, vector<1x4x342xf32>
    %2 = vector.shape_cast %1 : vector<1x4x342xf32> to vector<4x342xf32>
    %cst = arith.constant dense<0.000000e+00> : vector<8x342xf32>
    %3 = tpu.matmul %0, %2, %cst {dimension_numbers = #tpu.dot_dimension_numbers<[1], [0], [0], [1], [0, 0, 1, 1], [], []>, precision = #tpu.contract_precision<fp32>} : vector<8x4xf32>, vector<4x342xf32>, vector<8x342xf32> -> vector<8x342xf32>
    %c0_4 = arith.constant 0 : index
    %c0_5 = arith.constant 0 : index
    %4 = vector.load %arg5[%c0_4, %c0_5] : memref<8x1xf32, #tpu.memory_space<vmem>>, vector<8x1xf32>
    %5 = vector.broadcast %4 : vector<8x1xf32> to vector<8x342xf32>
    %6 = arith.addf %3, %5 : vector<8x342xf32>
    %cst_6 = arith.constant 2.000000e+01 : f32
    %7 = vector.broadcast %cst_6 : f32 to vector<8x342xf32>
    %8 = arith.minimumf %6, %7 : vector<8x342xf32>
    %9 = math.exp %8 : vector<8x342xf32>
    %cst_7 = arith.constant 2.000000e+00 : f32
    %10 = vector.broadcast %cst_7 : f32 to vector<8x342xf32>
    %11 = arith.addf %9, %10 : vector<8x342xf32>
    %12 = arith.mulf %9, %11 : vector<8x342xf32>
    %cst_8 = arith.constant 2.000000e+00 : f32
    %13 = vector.broadcast %cst_8 : f32 to vector<8x342xf32>
    %14 = arith.addf %12, %13 : vector<8x342xf32>
    %15 = arith.divf %12, %14 : vector<8x342xf32>
    %16 = arith.mulf %6, %15 : vector<8x342xf32>
    %c0_9 = arith.constant 0 : index
    %c0_10 = arith.constant 0 : index
    %17 = vector.load %arg2[%c0_9, %c0_10] : memref<1x342xf32, #tpu.memory_space<vmem>>, vector<1x342xf32>
    %18 = vector.broadcast %17 : vector<1x342xf32> to vector<8x342xf32>
    %19 = arith.mulf %16, %18 : vector<8x342xf32>
    %c0_11 = arith.constant 0 : index
    %c0_12 = arith.constant 0 : index
    %20 = vector.load %arg15[%c0_11, %c0_12] : memref<8x342xf32, #tpu.memory_space<vmem>>, vector<8x342xf32>
    tpu.vector_store %arg15[%c0_11, %c0_12], %19 {strides = array<i32>} : memref<8x342xf32, #tpu.memory_space<vmem>>, vector<8x342xf32>,
    %cst_13 = arith.constant 0.000000e+00 : f32
    %21 = vector.broadcast %cst_13 : f32 to vector<8x288xf32>
    %c0_14 = arith.constant 0 : index
    %c0_15 = arith.constant 0 : index
    %22 = vector.load %arg6[%c0_14, %c0_15] : memref<8x9xf32, #tpu.memory_space<vmem>>, vector<8x1xf32>
    %c0_16 = arith.constant 0 : index
    %c0_17 = arith.constant 0 : index
    %23 = vector.load %arg15[%c0_16, %c0_17] : memref<8x342xf32, #tpu.memory_space<vmem>>, vector<8x288xf32>
    %24 = vector.broadcast %22 : vector<8x1xf32> to vector<8x288xf32>
    %25 = arith.mulf %24, %23 : vector<8x288xf32>
    %26 = arith.addf %21, %25 : vector<8x288xf32>
    %c0_18 = arith.constant 0 : index
    %c1 = arith.constant 1 : index
    %27 = vector.load %arg6[%c0_18, %c1] : memref<8x9xf32, #tpu.memory_space<vmem>>, vector<8x1xf32>
    %c0_19 = arith.constant 0 : index
    %c1_20 = arith.constant 1 : index
    %28 = vector.load %arg15[%c0_19, %c1_20] : memref<8x342xf32, #tpu.memory_space<vmem>>, vector<8x288xf32>
    %29 = vector.broadcast %27 : vector<8x1xf32> to vector<8x288xf32>
    %30 = arith.mulf %29, %28 : vector<8x288xf32>
    %31 = arith.addf %26, %30 : vector<8x288xf32>
    %c0_21 = arith.constant 0 : index
    %c2 = arith.constant 2 : index
    %32 = vector.load %arg6[%c0_21, %c2] : memref<8x9xf32, #tpu.memory_space<vmem>>, vector<8x1xf32>
    %c0_22 = arith.constant 0 : index
    %c2_23 = arith.constant 2 : index
    %33 = vector.load %arg15[%c0_22, %c2_23] : memref<8x342xf32, #tpu.memory_space<vmem>>, vector<8x288xf32>
    %34 = vector.broadcast %32 : vector<8x1xf32> to vector<8x288xf32>
    %35 = arith.mulf %34, %33 : vector<8x288xf32>
    %36 = arith.addf %31, %35 : vector<8x288xf32>
    %c0_24 = arith.constant 0 : index
    %c3 = arith.constant 3 : index
    %37 = vector.load %arg6[%c0_24, %c3] : memref<8x9xf32, #tpu.memory_space<vmem>>, vector<8x1xf32>
    %c0_25 = arith.constant 0 : index
    %c18 = arith.constant 18 : index
    %38 = vector.load %arg15[%c0_25, %c18] : memref<8x342xf32, #tpu.memory_space<vmem>>, vector<8x288xf32>
    %39 = vector.broadcast %37 : vector<8x1xf32> to vector<8x288xf32>
    %40 = arith.mulf %39, %38 : vector<8x288xf32>
    %41 = arith.addf %36, %40 : vector<8x288xf32>
    %c0_26 = arith.constant 0 : index
    %c4 = arith.constant 4 : index
    %42 = vector.load %arg6[%c0_26, %c4] : memref<8x9xf32, #tpu.memory_space<vmem>>, vector<8x1xf32>
    %c0_27 = arith.constant 0 : index
    %c19 = arith.constant 19 : index
    %43 = vector.load %arg15[%c0_27, %c19] : memref<8x342xf32, #tpu.memory_space<vmem>>, vector<8x288xf32>
    %44 = vector.broadcast %42 : vector<8x1xf32> to vector<8x288xf32>
    %45 = arith.mulf %44, %43 : vector<8x288xf32>
    %46 = arith.addf %41, %45 : vector<8x288xf32>
    %c0_28 = arith.constant 0 : index
    %c5 = arith.constant 5 : index
    %47 = vector.load %arg6[%c0_28, %c5] : memref<8x9xf32, #tpu.memory_space<vmem>>, vector<8x1xf32>
    %c0_29 = arith.constant 0 : index
    %c20 = arith.constant 20 : index
    %48 = vector.load %arg15[%c0_29, %c20] : memref<8x342xf32, #tpu.memory_space<vmem>>, vector<8x288xf32>
    %49 = vector.broadcast %47 : vector<8x1xf32> to vector<8x288xf32>
    %50 = arith.mulf %49, %48 : vector<8x288xf32>
    %51 = arith.addf %46, %50 : vector<8x288xf32>
    %c0_30 = arith.constant 0 : index
    %c6 = arith.constant 6 : index
    %52 = vector.load %arg6[%c0_30, %c6] : memref<8x9xf32, #tpu.memory_space<vmem>>, vector<8x1xf32>
    %c0_31 = arith.constant 0 : index
    %c36 = arith.constant 36 : index
    %53 = vector.load %arg15[%c0_31, %c36] : memref<8x342xf32, #tpu.memory_space<vmem>>, vector<8x288xf32>
    %54 = vector.broadcast %52 : vector<8x1xf32> to vector<8x288xf32>
    %55 = arith.mulf %54, %53 : vector<8x288xf32>
    %56 = arith.addf %51, %55 : vector<8x288xf32>
    %c0_32 = arith.constant 0 : index
    %c7 = arith.constant 7 : index
    %57 = vector.load %arg6[%c0_32, %c7] : memref<8x9xf32, #tpu.memory_space<vmem>>, vector<8x1xf32>
    %c0_33 = arith.constant 0 : index
    %c37 = arith.constant 37 : index
    %58 = vector.load %arg15[%c0_33, %c37] : memref<8x342xf32, #tpu.memory_space<vmem>>, vector<8x288xf32>
    %59 = vector.broadcast %57 : vector<8x1xf32> to vector<8x288xf32>
    %60 = arith.mulf %59, %58 : vector<8x288xf32>
    %61 = arith.addf %56, %60 : vector<8x288xf32>
    %c0_34 = arith.constant 0 : index
    %c8 = arith.constant 8 : index
    %62 = vector.load %arg6[%c0_34, %c8] : memref<8x9xf32, #tpu.memory_space<vmem>>, vector<8x1xf32>
    %c0_35 = arith.constant 0 : index
    %c38 = arith.constant 38 : index
    %63 = vector.load %arg15[%c0_35, %c38] : memref<8x342xf32, #tpu.memory_space<vmem>>, vector<8x288xf32>
    %64 = vector.broadcast %62 : vector<8x1xf32> to vector<8x288xf32>
    %65 = arith.mulf %64, %63 : vector<8x288xf32>
    %66 = arith.addf %61, %65 : vector<8x288xf32>
    %c0_36 = arith.constant 0 : index
    %c0_37 = arith.constant 0 : index
    %67 = vector.load %arg7[%c0_36, %c0_37] : memref<8x1xf32, #tpu.memory_space<vmem>>, vector<8x1xf32>
    %68 = vector.broadcast %67 : vector<8x1xf32> to vector<8x288xf32>
    %69 = arith.addf %66, %68 : vector<8x288xf32>
    %cst_38 = arith.constant 2.000000e+01 : f32
    %70 = vector.broadcast %cst_38 : f32 to vector<8x288xf32>
    %71 = arith.minimumf %69, %70 : vector<8x288xf32>
    %72 = math.exp %71 : vector<8x288xf32>
    %cst_39 = arith.constant 2.000000e+00 : f32
    %73 = vector.broadcast %cst_39 : f32 to vector<8x288xf32>
    %74 = arith.addf %72, %73 : vector<8x288xf32>
    %75 = arith.mulf %72, %74 : vector<8x288xf32>
    %cst_40 = arith.constant 2.000000e+00 : f32
    %76 = vector.broadcast %cst_40 : f32 to vector<8x288xf32>
    %77 = arith.addf %75, %76 : vector<8x288xf32>
    %78 = arith.divf %75, %77 : vector<8x288xf32>
    %79 = arith.mulf %69, %78 : vector<8x288xf32>
    %c0_41 = arith.constant 0 : index
    %c0_42 = arith.constant 0 : index
    %80 = vector.load %arg3[%c0_41, %c0_42] : memref<1x288xf32, #tpu.memory_space<vmem>>, vector<1x288xf32>
    %81 = vector.broadcast %80 : vector<1x288xf32> to vector<8x288xf32>
    %82 = arith.mulf %79, %81 : vector<8x288xf32>
    %cst_43 = arith.constant dense<0.000000e+00> : vector<8xf32>
    %83 = vector.multi_reduction <add>, %82, %cst_43 [1] : vector<8x288xf32> to vector<8xf32>
    %84 = vector.shape_cast %83 : vector<8xf32> to vector<8x1xf32>
    %cst_44 = arith.constant 3.906250e-03 : f32
    %85 = vector.broadcast %cst_44 : f32 to vector<8x1xf32>
    %86 = arith.mulf %84, %85 : vector<8x1xf32>
    %c0_45 = arith.constant 0 : index
    %c0_46 = arith.constant 0 : index
    %87 = vector.load %arg8[%c0_45, %c0_46] : memref<8x2xf32, #tpu.memory_space<vmem>>, vector<8x2xf32>
    %88 = vector.broadcast %86 : vector<8x1xf32> to vector<8x2xf32>
    %89 = arith.mulf %87, %88 : vector<8x2xf32>
    %cst_47 = arith.constant dense<0.000000e+00> : vector<2xf32>
    %90 = vector.multi_reduction <add>, %89, %cst_47 [0] : vector<8x2xf32> to vector<2xf32>
    %91 = vector.shape_cast %90 : vector<2xf32> to vector<1x2xf32>
    %c0_48 = arith.constant 0 : index
    %c0_49 = arith.constant 0 : index
    %92 = vector.load %arg9[%c0_48, %c0_49] : memref<1x2xf32, #tpu.memory_space<vmem>>, vector<1x2xf32>
    %93 = arith.addf %91, %92 : vector<1x2xf32>
    %cst_50 = arith.constant 0.000000e+00 : f32
    %94 = vector.broadcast %cst_50 : f32 to vector<1x2xf32>
    %95 = arith.maximumf %93, %94 : vector<1x2xf32>
    %c0_51 = arith.constant 0 : index
    %c0_52 = arith.constant 0 : index
    %96 = vector.load %arg10[%c0_51, %c0_52] : memref<8x2xf32, #tpu.memory_space<vmem>>, vector<8x2xf32>
    %97 = vector.broadcast %95 : vector<1x2xf32> to vector<8x2xf32>
    %98 = arith.mulf %96, %97 : vector<8x2xf32>
    %cst_53 = arith.constant dense<0.000000e+00> : vector<8xf32>
    %99 = vector.multi_reduction <add>, %98, %cst_53 [1] : vector<8x2xf32> to vector<8xf32>
    %100 = vector.shape_cast %99 : vector<8xf32> to vector<8x1xf32>
    %c0_54 = arith.constant 0 : index
    %c0_55 = arith.constant 0 : index
    %101 = vector.load %arg11[%c0_54, %c0_55] : memref<8x1xf32, #tpu.memory_space<vmem>>, vector<8x1xf32>
    %102 = arith.addf %100, %101 : vector<8x1xf32>
    %cst_56 = arith.constant 3.000000e+00 : f32
    %103 = vector.broadcast %cst_56 : f32 to vector<8x1xf32>
    %104 = arith.addf %102, %103 : vector<8x1xf32>
    %cst_57 = arith.constant 0.000000e+00 : f32
    %cst_58 = arith.constant 6.000000e+00 : f32
    %105 = vector.broadcast %cst_57 : f32 to vector<8x1xf32>
    %106 = arith.maximumf %105, %104 : vector<8x1xf32>
    %107 = vector.broadcast %cst_58 : f32 to vector<8x1xf32>
    %108 = arith.minimumf %107, %106 : vector<8x1xf32>
    %cst_59 = arith.constant 0.166666672 : f32
    %109 = vector.broadcast %cst_59 : f32 to vector<8x1xf32>
    %110 = arith.mulf %108, %109 : vector<8x1xf32>
    %111 = vector.broadcast %110 : vector<8x1xf32> to vector<8x288xf32>
    %112 = arith.mulf %82, %111 : vector<8x288xf32>
    %c0_60 = arith.constant 0 : index
    %c0_61 = arith.constant 0 : index
    %113 = vector.load %arg12[%c0_60, %c0_61] : memref<4x8xf32, #tpu.memory_space<vmem>>, vector<4x8xf32>
    %cst_62 = arith.constant dense<0.000000e+00> : vector<4x288xf32>
    %114 = tpu.matmul %113, %112, %cst_62 {dimension_numbers = #tpu.dot_dimension_numbers<[1], [0], [0], [1], [0, 0, 1, 1], [], []>, precision = #tpu.contract_precision<fp32>} : vector<4x8xf32>, vector<8x288xf32>, vector<4x288xf32> -> vector<4x288xf32>
    %c0_63 = arith.constant 0 : index
    %c0_64 = arith.constant 0 : index
    %115 = vector.load %arg13[%c0_63, %c0_64] : memref<4x1xf32, #tpu.memory_space<vmem>>, vector<4x1xf32>
    %116 = vector.broadcast %115 : vector<4x1xf32> to vector<4x288xf32>
    %117 = arith.addf %114, %116 : vector<4x288xf32>
    %c0_65 = arith.constant 0 : index
    %c0_66 = arith.constant 0 : index
    %c19_67 = arith.constant 19 : index
    %118 = vector.load %arg1[%c0_65, %c0_66, %c19_67] : memref<1x4x342xf32, #tpu.memory_space<vmem>>, vector<1x4x288xf32>
    %119 = vector.shape_cast %118 : vector<1x4x288xf32> to vector<4x288xf32>
    %120 = arith.addf %117, %119 : vector<4x288xf32>
    %c0_68 = arith.constant 0 : index
    %c0_69 = arith.constant 0 : index
    %c0_70 = arith.constant 0 : index
    %121 = vector.load %arg14[%c0_68, %c0_69, %c0_70] : memref<1x4x288xf32, #tpu.memory_space<vmem>>, vector<1x4x288xf32>
    %122 = vector.shape_cast %121 : vector<1x4x288xf32> to vector<4x288xf32>
    %123 = vector.shape_cast %120 : vector<4x288xf32> to vector<1x4x288xf32>
    tpu.vector_store %arg14[%c0_68, %c0_69, %c0_70], %123 {strides = array<i32>} : memref<1x4x288xf32, #tpu.memory_space<vmem>>, vector<1x4x288xf32>,
    return
  }
  func.func @transform_0(%arg0: i32) -> (i32, i32, i32) {
    %c0_i32 = arith.constant 0 : i32
    %c0_i32_0 = arith.constant 0 : i32
    %c0_i32_1 = arith.constant 0 : i32
    return %arg0, %c0_i32, %c0_i32_0 : i32, i32, i32
  }
  func.func @transform_1(%arg0: i32) -> (i32, i32) {
    %c0_i32 = arith.constant 0 : i32
    %c0_i32_0 = arith.constant 0 : i32
    %c0_i32_1 = arith.constant 0 : i32
    return %c0_i32, %c0_i32_0 : i32, i32
  }
  func.func @transform_2(%arg0: i32) -> (i32, i32) {
    %c0_i32 = arith.constant 0 : i32
    %c0_i32_0 = arith.constant 0 : i32
    %c0_i32_1 = arith.constant 0 : i32
    return %c0_i32, %c0_i32_0 : i32, i32
  }
  func.func @transform_3(%arg0: i32) -> (i32, i32) {
    %c0_i32 = arith.constant 0 : i32
    %c0_i32_0 = arith.constant 0 : i32
    %c0_i32_1 = arith.constant 0 : i32
    return %c0_i32, %c0_i32_0 : i32, i32
  }
  func.func @transform_4(%arg0: i32) -> (i32, i32) {
    %c0_i32 = arith.constant 0 : i32
    %c0_i32_0 = arith.constant 0 : i32
    %c0_i32_1 = arith.constant 0 : i32
    return %c0_i32, %c0_i32_0 : i32, i32
  }
  func.func @transform_5(%arg0: i32) -> (i32, i32) {
    %c0_i32 = arith.constant 0 : i32
    %c0_i32_0 = arith.constant 0 : i32
    %c0_i32_1 = arith.constant 0 : i32
    return %c0_i32, %c0_i32_0 : i32, i32
  }
  func.func @transform_6(%arg0: i32) -> (i32, i32) {
    %c0_i32 = arith.constant 0 : i32
    %c0_i32_0 = arith.constant 0 : i32
    %c0_i32_1 = arith.constant 0 : i32
    return %c0_i32, %c0_i32_0 : i32, i32
  }
  func.func @transform_7(%arg0: i32) -> (i32, i32) {
    %c0_i32 = arith.constant 0 : i32
    %c0_i32_0 = arith.constant 0 : i32
    %c0_i32_1 = arith.constant 0 : i32
    return %c0_i32, %c0_i32_0 : i32, i32
  }
  func.func @transform_8(%arg0: i32) -> (i32, i32) {
    %c0_i32 = arith.constant 0 : i32
    %c0_i32_0 = arith.constant 0 : i32
    %c0_i32_1 = arith.constant 0 : i32
    return %c0_i32, %c0_i32_0 : i32, i32
  }
  func.func @transform_9(%arg0: i32) -> (i32, i32) {
    %c0_i32 = arith.constant 0 : i32
    %c0_i32_0 = arith.constant 0 : i32
    %c0_i32_1 = arith.constant 0 : i32
    return %c0_i32, %c0_i32_0 : i32, i32
  }
  func.func @transform_10(%arg0: i32) -> (i32, i32) {
    %c0_i32 = arith.constant 0 : i32
    %c0_i32_0 = arith.constant 0 : i32
    %c0_i32_1 = arith.constant 0 : i32
    return %c0_i32, %c0_i32_0 : i32, i32
  }
  func.func @transform_11(%arg0: i32) -> (i32, i32) {
    %c0_i32 = arith.constant 0 : i32
    %c0_i32_0 = arith.constant 0 : i32
    %c0_i32_1 = arith.constant 0 : i32
    return %c0_i32, %c0_i32_0 : i32, i32
  }
  func.func @transform_12(%arg0: i32) -> (i32, i32) {
    %c0_i32 = arith.constant 0 : i32
    %c0_i32_0 = arith.constant 0 : i32
    %c0_i32_1 = arith.constant 0 : i32
    return %c0_i32, %c0_i32_0 : i32, i32
  }
  func.func @transform_13(%arg0: i32) -> (i32, i32, i32) {
    %c0_i32 = arith.constant 0 : i32
    %c0_i32_0 = arith.constant 0 : i32
    %c0_i32_1 = arith.constant 0 : i32
    return %arg0, %c0_i32, %c0_i32_0 : i32, i32, i32
  }
}

</mosaic_0001>

<llo_original>
// kernel: tpu_custom_call.1
$region0: #{tpu_custom_call.1}
  #allocation0 [shape = 'u32[]', space=smem, size = 0x4, offset = 0x4, fixed_abs, tag = 'smem constant byte address 0x4 - core index']
  #allocation1 [shape = 'u32[144,128]{1,0:T(1,128)}', space=vmem, size = 0x12000, scoped, tag = 'internal scratch']
  #allocation2 [shape = 'f32[8,342]{1,0:T(8,128)}', space=vmem, size = 0x3000, scoped, tag = 'scratch operand']
  %s0 = inlined_call_operand.vmem [shape: f32[4,4,342], index: 0, kind: input, shape index: {}]
  %s1 = inlined_call_operand.vmem [shape: f32[1,342], index: 1, kind: input, shape index: {}]
  %s2 = inlined_call_operand.hbm [shape: f32[1,288], index: 2, kind: input, shape index: {}]
  %s3 = inlined_call_operand.vmem [shape: f32[8,4], index: 3, kind: input, shape index: {}]
  %s4 = inlined_call_operand.vmem [shape: f32[8,1], index: 4, kind: input, shape index: {}]
  %s5 = inlined_call_operand.vmem [shape: f32[8,9], index: 5, kind: input, shape index: {}]
  %s6 = inlined_call_operand.vmem [shape: f32[8,1], index: 6, kind: input, shape index: {}]
  %s7 = inlined_call_operand.vmem [shape: f32[8,2], index: 7, kind: input, shape index: {}]
  %s8 = inlined_call_operand.vmem [shape: f32[1,2], index: 8, kind: input, shape index: {}]
  %s9 = inlined_call_operand.vmem [shape: f32[8,2], index: 9, kind: input, shape index: {}]
  %s10 = inlined_call_operand.vmem [shape: f32[8,1], index: 10, kind: input, shape index: {}]
  %s11 = inlined_call_operand.vmem [shape: f32[4,8], index: 11, kind: input, shape index: {}]
  %s12 = inlined_call_operand.vmem [shape: f32[4,1], index: 12, kind: input, shape index: {}]
  %s13 = inlined_call_operand.hbm [shape: f32[4,4,288], index: 13, kind: output, shape index: {}]
  %s14 = sld [smem:[#allocation0]]
  $region89: #{tpu_custom_call.1} parent=0
    _
  %s16 = ssub.s32 1, %s14
  %s17 = scalar_select 0, %s16, %s14
  $region1: #{tpu_custom_call.1} parent=0
    #allocation3 [shape = 'u8[1536]{0}', space=vmem, size = 0x800, scoped, tag = 'input window, operand 2, single buffered']
    #allocation4 [shape = 's32[2]{0}', space=sflag, size = 0x8, scoped, tag = 'scoped memory for tpu_custom_call.1']
    #allocation5 [shape = 's32[2]{0}', space=sflag, size = 0x8, scoped, tag = 'scoped memory for tpu_custom_call.1']
    #allocation6 [shape = 'u8[12288]{0}', space=vmem, size = 0x3000, scoped, tag = 'output window, operand 0']
    %18 = vsyncpa [#allocation4], 0
    %19 = vsyncpa [#allocation5], 0
    %s20 = scalar_lea.sflag [#allocation5], 1
    %21 = vsyncpa %s20, 0
    loop: start=0, step=1, limit=6
    $region2: #{tpu_custom_call.1} parent=1 // loop_pre_header
      _
    $region3: #{tpu_custom_call.1} parent=1 // loop_header
      %s23 = sphi 0, %s27
      %p24 = scmp.ge.s32.totalorder %s23, 6
      %s33 = sphi 0, %s35
      %s36 = sphi 0, %s33
      %s37 = sphi 0, %s36
      %s53 = sphi 0, %s37
      %s57 = sphi 0, %s57
      %s59 = sphi 0, %s57
      %s60 = sphi 0, %s59
      %s74 = sphi 0, %s60
      %s78 = sphi 0, %s78
      %s80 = sphi 0, %s78
      %s81 = sphi 0, %s80
      %s95 = sphi 0, %s81
      %s99 = sphi 0, %s99
      %s101 = sphi 0, %s99
      %s102 = sphi 0, %s101
      %s116 = sphi 0, %s102
      %s120 = sphi 0, %s120
      %s122 = sphi 0, %s120
      %s123 = sphi 0, %s122
      %s137 = sphi 0, %s123
      %s141 = sphi 0, %s141
      %s143 = sphi 0, %s141
      %s144 = sphi 0, %s143
      %s158 = sphi 0, %s144
      %s162 = sphi 0, %s162
      %s164 = sphi 0, %s162
      %s165 = sphi 0, %s164
      %s179 = sphi 0, %s165
      %s183 = sphi 0, %s183
      %s185 = sphi 0, %s183
      %s186 = sphi 0, %s185
      %s200 = sphi 0, %s186
      %s204 = sphi 0, %s204
      %s206 = sphi 0, %s204
      %s207 = sphi 0, %s206
      %s221 = sphi 0, %s207
      %s225 = sphi 0, %s225
      %s227 = sphi 0, %s225
      %s228 = sphi 0, %s227
      %s242 = sphi 0, %s228
      %s246 = sphi 0, %s246
      %s248 = sphi 0, %s246
      %s249 = sphi 0, %s248
      %s263 = sphi 0, %s249
      %s267 = sphi 0, %s267
      %s269 = sphi 0, %s267
      %s270 = sphi 0, %s269
      %s284 = sphi 0, %s270
      %s288 = sphi 0, %s288
      %s290 = sphi 0, %s288
      %s291 = sphi 0, %s290
      %s305 = sphi 0, %s291
      %s311 = sphi 0, %s313
      %s314 = sphi 0, %s311
      %s315 = sphi 0, %s314
      %s331 = sphi 0, %s315
    $region4: #{tpu_custom_call.1} parent=1 // loop_header_branch
      %26 = sbr.rel (%p24) target = $region8
    $region5: #{tpu_custom_call.1} parent=1 // loop_body
      %s28 = ssub.s32 %s23, 1
      %s29 = ssub.s32 %s23, 2
      %s30 = sadd.s32 %s23, 1
      %s31 = ssub.s32 %s23, %s30
      %p32 = scmp.eq.s32.totalorder %s31, 0
      %s34 = sadd.s32 %s33, 1
      %s35 = scalar_select %p32, %s33, %s34
      %p38 = pneg %p32
      %p39 = scmp.eq.s32.totalorder %s23, 3
      %p40 = por %p38, %p39
      %p41 = scmp.ne.s32.totalorder %s33, %s36
      %p42 = scmp.eq.s32.totalorder %s23, 0
      %p43 = por %p41, %p42
      %p44 = scmp.ne.s32.totalorder %s33, %s36
      %p45 = scmp.eq.s32.totalorder %s28, 3
      %p46 = por %p44, %p45
      %p47 = scmp.ne.s32.totalorder %s36, %s37
      %p48 = scmp.eq.s32.totalorder %s28, 0
      %p49 = por %p47, %p48
      %p50 = scmp.ne.s32.totalorder %s36, %s37
      %p51 = scmp.eq.s32.totalorder %s29, 3
      %p52 = por %p50, %p51
      %p54 = scmp.ne.s32.totalorder %s37, %s53
      %p55 = scmp.eq.s32.totalorder %s29, 0
      %p56 = por %p54, %p55
      %s58 = sadd.s32 %s57, 1
      %p61 = scmp.eq.s32.totalorder %s23, 3
      %p62 = scmp.ne.s32.totalorder %s57, %s59
      %p63 = scmp.eq.s32.totalorder %s23, 0
      %p64 = por %p62, %p63
      %p65 = scmp.ne.s32.totalorder %s57, %s59
      %p66 = scmp.eq.s32.totalorder %s28, 3
      %p67 = por %p65, %p66
      %p68 = scmp.ne.s32.totalorder %s59, %s60
      %p69 = scmp.eq.s32.totalorder %s28, 0
      %p70 = por %p68, %p69
      %p71 = scmp.ne.s32.totalorder %s59, %s60
      %p72 = scmp.eq.s32.totalorder %s29, 3
      %p73 = por %p71, %p72
      %p75 = scmp.ne.s32.totalorder %s60, %s74
      %p76 = scmp.eq.s32.totalorder %s29, 0
      %p77 = por %p75, %p76
      %s79 = sadd.s32 %s78, 1
      %p82 = scmp.eq.s32.totalorder %s23, 3
      %p83 = scmp.ne.s32.totalorder %s78, %s80
      %p84 = scmp.eq.s32.totalorder %s23, 0
      %p85 = por %p83, %p84
      %p86 = scmp.ne.s32.totalorder %s78, %s80
      %p87 = scmp.eq.s32.totalorder %s28, 3
      %p88 = por %p86, %p87
      %p89 = scmp.ne.s32.totalorder %s80, %s81
      %p90 = scmp.eq.s32.totalorder %s28, 0
      %p91 = por %p89, %p90
      %p92 = scmp.ne.s32.totalorder %s80, %s81
      %p93 = scmp.eq.s32.totalorder %s29, 3
      %p94 = por %p92, %p93
      %p96 = scmp.ne.s32.totalorder %s81, %s95
      %p97 = scmp.eq.s32.totalorder %s29, 0
      %p98 = por %p96, %p97
      %s100 = sadd.s32 %s99, 1
      %p103 = scmp.eq.s32.totalorder %s23, 3
      %p104 = scmp.ne.s32.totalorder %s99, %s101
      %p105 = scmp.eq.s32.totalorder %s23, 0
      %p106 = por %p104, %p105
      %p107 = scmp.ne.s32.totalorder %s99, %s101
      %p108 = scmp.eq.s32.totalorder %s28, 3
      %p109 = por %p107, %p108
      %p110 = scmp.ne.s32.totalorder %s101, %s102
      %p111 = scmp.eq.s32.totalorder %s28, 0
      %p112 = por %p110, %p111
      %p113 = scmp.ne.s32.totalorder %s101, %s102
      %p114 = scmp.eq.s32.totalorder %s29, 3
      %p115 = por %p113, %p114
      %p117 = scmp.ne.s32.totalorder %s102, %s116
      %p118 = scmp.eq.s32.totalorder %s29, 0
      %p119 = por %p117, %p118
      %s121 = sadd.s32 %s120, 1
      %p124 = scmp.eq.s32.totalorder %s23, 3
      %p125 = scmp.ne.s32.totalorder %s120, %s122
      %p126 = scmp.eq.s32.totalorder %s23, 0
      %p127 = por %p125, %p126
      %p128 = scmp.ne.s32.totalorder %s120, %s122
      %p129 = scmp.eq.s32.totalorder %s28, 3
      %p130 = por %p128, %p129
      %p131 = scmp.ne.s32.totalorder %s122, %s123
      %p132 = scmp.eq.s32.totalorder %s28, 0
      %p133 = por %p131, %p132
      %p134 = scmp.ne.s32.totalorder %s122, %s123
      %p135 = scmp.eq.s32.totalorder %s29, 3
      %p136 = por %p134, %p135
      %p138 = scmp.ne.s32.totalorder %s123, %s137
      %p139 = scmp.eq.s32.totalorder %s29, 0
      %p140 = por %p138, %p139
      %s142 = sadd.s32 %s141, 1
      %p145 = scmp.eq.s32.totalorder %s23, 3
      %p146 = scmp.ne.s32.totalorder %s141, %s143
      %p147 = scmp.eq.s32.totalorder %s23, 0
      %p148 = por %p146, %p147
      %p149 = scmp.ne.s32.totalorder %s141, %s143
      %p150 = scmp.eq.s32.totalorder %s28, 3
      %p151 = por %p149, %p150
      %p152 = scmp.ne.s32.totalorder %s143, %s144
      %p153 = scmp.eq.s32.totalorder %s28, 0
      %p154 = por %p152, %p153
      %p155 = scmp.ne.s32.totalorder %s143, %s144
      %p156 = scmp.eq.s32.totalorder %s29, 3
      %p157 = por %p155, %p156
      %p159 = scmp.ne.s32.totalorder %s144, %s158
      %p160 = scmp.eq.s32.totalorder %s29, 0
      %p161 = por %p159, %p160
      %s163 = sadd.s32 %s162, 1
      %p166 = scmp.eq.s32.totalorder %s23, 3
      %p167 = scmp.ne.s32.totalorder %s162, %s164
      %p168 = scmp.eq.s32.totalorder %s23, 0
      %p169 = por %p167, %p168
      %p170 = scmp.ne.s32.totalorder %s162, %s164
      %p171 = scmp.eq.s32.totalorder %s28, 3
      %p172 = por %p170, %p171
      %p173 = scmp.ne.s32.totalorder %s164, %s165
      %p174 = scmp.eq.s32.totalorder %s28, 0
      %p175 = por %p173, %p174
      %p176 = scmp.ne.s32.totalorder %s164, %s165
      %p177 = scmp.eq.s32.totalorder %s29, 3
      %p178 = por %p176, %p177
      %p180 = scmp.ne.s32.totalorder %s165, %s179
      %p181 = scmp.eq.s32.totalorder %s29, 0
      %p182 = por %p180, %p181
      %s184 = sadd.s32 %s183, 1
      %p187 = scmp.eq.s32.totalorder %s23, 3
      %p188 = scmp.ne.s32.totalorder %s183, %s185
      %p189 = scmp.eq.s32.totalorder %s23, 0
      %p190 = por %p188, %p189
      %p191 = scmp.ne.s32.totalorder %s183, %s185
      %p192 = scmp.eq.s32.totalorder %s28, 3
      %p193 = por %p191, %p192
      %p194 = scmp.ne.s32.totalorder %s185, %s186
      %p195 = scmp.eq.s32.totalorder %s28, 0
      %p196 = por %p194, %p195
      %p197 = scmp.ne.s32.totalorder %s185, %s186
      %p198 = scmp.eq.s32.totalorder %s29, 3
      %p199 = por %p197, %p198
      %p201 = scmp.ne.s32.totalorder %s186, %s200
      %p202 = scmp.eq.s32.totalorder %s29, 0
      %p203 = por %p201, %p202
      %s205 = sadd.s32 %s204, 1
      %p208 = scmp.eq.s32.totalorder %s23, 3
      %p209 = scmp.ne.s32.totalorder %s204, %s206
      %p210 = scmp.eq.s32.totalorder %s23, 0
      %p211 = por %p209, %p210
      %p212 = scmp.ne.s32.totalorder %s204, %s206
      %p213 = scmp.eq.s32.totalorder %s28, 3
      %p214 = por %p212, %p213
      %p215 = scmp.ne.s32.totalorder %s206, %s207
      %p216 = scmp.eq.s32.totalorder %s28, 0
      %p217 = por %p215, %p216
      %p218 = scmp.ne.s32.totalorder %s206, %s207
      %p219 = scmp.eq.s32.totalorder %s29, 3
      %p220 = por %p218, %p219
      %p222 = scmp.ne.s32.totalorder %s207, %s221
      %p223 = scmp.eq.s32.totalorder %s29, 0
      %p224 = por %p222, %p223
      %s226 = sadd.s32 %s225, 1
      %p229 = scmp.eq.s32.totalorder %s23, 3
      %p230 = scmp.ne.s32.totalorder %s225, %s227
      %p231 = scmp.eq.s32.totalorder %s23, 0
      %p232 = por %p230, %p231
      %p233 = scmp.ne.s32.totalorder %s225, %s227
      %p234 = scmp.eq.s32.totalorder %s28, 3
      %p235 = por %p233, %p234
      %p236 = scmp.ne.s32.totalorder %s227, %s228
      %p237 = scmp.eq.s32.totalorder %s28, 0
      %p238 = por %p236, %p237
      %p239 = scmp.ne.s32.totalorder %s227, %s228
      %p240 = scmp.eq.s32.totalorder %s29, 3
      %p241 = por %p239, %p240
      %p243 = scmp.ne.s32.totalorder %s228, %s242
      %p244 = scmp.eq.s32.totalorder %s29, 0
      %p245 = por %p243, %p244
      %s247 = sadd.s32 %s246, 1
      %p250 = scmp.eq.s32.totalorder %s23, 3
      %p251 = scmp.ne.s32.totalorder %s246, %s248
      %p252 = scmp.eq.s32.totalorder %s23, 0
      %p253 = por %p251, %p252
      %p254 = scmp.ne.s32.totalorder %s246, %s248
      %p255 = scmp.eq.s32.totalorder %s28, 3
      %p256 = por %p254, %p255
      %p257 = scmp.ne.s32.totalorder %s248, %s249
      %p258 = scmp.eq.s32.totalorder %s28, 0
      %p259 = por %p257, %p258
      %p260 = scmp.ne.s32.totalorder %s248, %s249
      %p261 = scmp.eq.s32.totalorder %s29, 3
      %p262 = por %p260, %p261
      %p264 = scmp.ne.s32.totalorder %s249, %s263
      %p265 = scmp.eq.s32.totalorder %s29, 0
      %p266 = por %p264, %p265
      %s268 = sadd.s32 %s267, 1
      %p271 = scmp.eq.s32.totalorder %s23, 3
      %p272 = scmp.ne.s32.totalorder %s267, %s269
      %p273 = scmp.eq.s32.totalorder %s23, 0
      %p274 = por %p272, %p273
      %p275 = scmp.ne.s32.totalorder %s267, %s269
      %p276 = scmp.eq.s32.totalorder %s28, 3
      %p277 = por %p275, %p276
      %p278 = scmp.ne.s32.totalorder %s269, %s270
      %p279 = scmp.eq.s32.totalorder %s28, 0
      %p280 = por %p278, %p279
      %p281 = scmp.ne.s32.totalorder %s269, %s270
      %p282 = scmp.eq.s32.totalorder %s29, 3
      %p283 = por %p281, %p282
      %p285 = scmp.ne.s32.totalorder %s270, %s284
      %p286 = scmp.eq.s32.totalorder %s29, 0
      %p287 = por %p285, %p286
      %s289 = sadd.s32 %s288, 1
      %p292 = scmp.eq.s32.totalorder %s23, 3
      %p293 = scmp.ne.s32.totalorder %s288, %s290
      %p294 = scmp.eq.s32.totalorder %s23, 0
      %p295 = por %p293, %p294
      %p296 = scmp.ne.s32.totalorder %s288, %s290
      %p297 = scmp.eq.s32.totalorder %s28, 3
      %p298 = por %p296, %p297
      %p299 = scmp.ne.s32.totalorder %s290, %s291
      %p300 = scmp.eq.s32.totalorder %s28, 0
      %p301 = por %p299, %p300
      %p302 = scmp.ne.s32.totalorder %s290, %s291
      %p303 = scmp.eq.s32.totalorder %s29, 3
      %p304 = por %p302, %p303
      %p306 = scmp.ne.s32.totalorder %s291, %s305
      %p307 = scmp.eq.s32.totalorder %s29, 0
      %p308 = por %p306, %p307
      %s309 = ssub.s32 %s23, %s30
      %p310 = scmp.eq.s32.totalorder %s309, 0
      %s312 = sadd.s32 %s311, 1
      %s313 = scalar_select %p310, %s311, %s312
      %p316 = pneg %p310
      %p317 = scmp.eq.s32.totalorder %s23, 3
      %p318 = por %p316, %p317
      %p319 = scmp.ne.s32.totalorder %s311, %s314
      %p320 = scmp.eq.s32.totalorder %s23, 0
      %p321 = por %p319, %p320
      %p322 = scmp.ne.s32.totalorder %s311, %s314
      %p323 = scmp.eq.s32.totalorder %s28, 3
      %p324 = por %p322, %p323
      %p325 = scmp.ne.s32.totalorder %s314, %s315
      %p326 = scmp.eq.s32.totalorder %s28, 0
      %p327 = por %p325, %p326
      %p328 = scmp.ne.s32.totalorder %s314, %s315
      %p329 = scmp.eq.s32.totalorder %s29, 3
      %p330 = por %p328, %p329
      %p332 = scmp.ne.s32.totalorder %s315, %s331
      %p333 = scmp.eq.s32.totalorder %s29, 0
      %p334 = por %p332, %p333
      %p335 = scmp.le.s32.totalorder 1, %s23
      %p336 = scmp.lt.s32.totalorder %s23, 5
      %p337 = pnand %p335, %p336
      %p338 = pneg %p337
      // Predicated region
      $region9: #{tpu_custom_call.1} parent=5 // pred_check
        _
      $region10: #{tpu_custom_call.1} parent=5 // pred_check_branch
        %340 = sbr.rel (%p337) target = $region12
      $region11: #{tpu_custom_call.1} parent=5 // pred_region
        %s341 = ssub.s32 %s23, 1
        // Predicated region
        $region13: #{tpu_custom_call.1} parent=11 // pred_check
          %p342 = pneg %p70
        $region14: #{tpu_custom_call.1} parent=11 // pred_check_branch
          %344 = sbr.rel (%p342) target = $region16
        $region15: #{tpu_custom_call.1} parent=11 // pred_region
          _
        $region16: #{tpu_custom_call.1} parent=11 // pred_fallthru
          _
        // Predicated region
        $region17: #{tpu_custom_call.1} parent=11 // pred_check
          %p345 = pneg %p91
        $region18: #{tpu_custom_call.1} parent=11 // pred_check_branch
          %347 = sbr.rel (%p345) target = $region20
        $region19: #{tpu_custom_call.1} parent=11 // pred_region
          %s349 = ssub.s32 48, 48
          %350 = vsyncadd [#allocation4], %s349
          %s352 = sshll.u32 [#allocation3], 4
          %s353 = int_to_ptr.vmem [resolvable:$true] %s352
          %355 = dma.hbm_to_vmem [thread:$0]  %s2, 48, %s353, [#allocation4]
        $region20: #{tpu_custom_call.1} parent=11 // pred_fallthru
          _
        // Predicated region
        $region21: #{tpu_custom_call.1} parent=11 // pred_check
          %p356 = pneg %p112
        $region22: #{tpu_custom_call.1} parent=11 // pred_check_branch
          %358 = sbr.rel (%p356) target = $region24
        $region23: #{tpu_custom_call.1} parent=11 // pred_region
          _
        $region24: #{tpu_custom_call.1} parent=11 // pred_fallthru
          _
        // Predicated region
        $region25: #{tpu_custom_call.1} parent=11 // pred_check
          %p359 = pneg %p133
        $region26: #{tpu_custom_call.1} parent=11 // pred_check_branch
          %361 = sbr.rel (%p359) target = $region28
        $region27: #{tpu_custom_call.1} parent=11 // pred_region
          _
        $region28: #{tpu_custom_call.1} parent=11 // pred_fallthru
          _
        // Predicated region
        $region29: #{tpu_custom_call.1} parent=11 // pred_check
          %p362 = pneg %p154
        $region30: #{tpu_custom_call.1} parent=11 // pred_check_branch
          %364 = sbr.rel (%p362) target = $region32
        $region31: #{tpu_custom_call.1} parent=11 // pred_region
          _
        $region32: #{tpu_custom_call.1} parent=11 // pred_fallthru
          _
        // Predicated region
        $region33: #{tpu_custom_call.1} parent=11 // pred_check
          %p365 = pneg %p175
        $region34: #{tpu_custom_call.1} parent=11 // pred_check_branch
          %367 = sbr.rel (%p365) target = $region36
        $region35: #{tpu_custom_call.1} parent=11 // pred_region
          _
        $region36: #{tpu_custom_call.1} parent=11 // pred_fallthru
          _
        // Predicated region
        $region37: #{tpu_custom_call.1} parent=11 // pred_check
          %p368 = pneg %p196
        $region38: #{tpu_custom_call.1} parent=11 // pred_check_branch
          %370 = sbr.rel (%p368) target = $region40
        $region39: #{tpu_custom_call.1} parent=11 // pred_region
          _
        $region40: #{tpu_custom_call.1} parent=11 // pred_fallthru
          _
        // Predicated region
        $region41: #{tpu_custom_call.1} parent=11 // pred_check
          %p371 = pneg %p217
        $region42: #{tpu_custom_call.1} parent=11 // pred_check_branch
          %373 = sbr.rel (%p371) target = $region44
        $region43: #{tpu_custom_call.1} parent=11 // pred_region
          _
        $region44: #{tpu_custom_call.1} parent=11 // pred_fallthru
          _
        // Predicated region
        $region45: #{tpu_custom_call.1} parent=11 // pred_check
          %p374 = pneg %p238
        $region46: #{tpu_custom_call.1} parent=11 // pred_check_branch
          %376 = sbr.rel (%p374) target = $region48
        $region47: #{tpu_custom_call.1} parent=11 // pred_region
          _
        $region48: #{tpu_custom_call.1} parent=11 // pred_fallthru
          _
        // Predicated region
        $region49: #{tpu_custom_call.1} parent=11 // pred_check
          %p377 = pneg %p259
        $region50: #{tpu_custom_call.1} parent=11 // pred_check_branch
          %379 = sbr.rel (%p377) target = $region52
        $region51: #{tpu_custom_call.1} parent=11 // pred_region
          _
        $region52: #{tpu_custom_call.1} parent=11 // pred_fallthru
          _
        // Predicated region
        $region53: #{tpu_custom_call.1} parent=11 // pred_check
          %p380 = pneg %p280
        $region54: #{tpu_custom_call.1} parent=11 // pred_check_branch
          %382 = sbr.rel (%p380) target = $region56
        $region55: #{tpu_custom_call.1} parent=11 // pred_region
          _
        $region56: #{tpu_custom_call.1} parent=11 // pred_fallthru
          _
        // Predicated region
        $region57: #{tpu_custom_call.1} parent=11 // pred_check
          %p383 = pneg %p301
        $region58: #{tpu_custom_call.1} parent=11 // pred_check_branch
          %385 = sbr.rel (%p383) target = $region60
        $region59: #{tpu_custom_call.1} parent=11 // pred_region
          _
        $region60: #{tpu_custom_call.1} parent=11 // pred_fallthru
          _
      $region12: #{tpu_custom_call.1} parent=5 // pred_fallthru
        _
      %p386 = scmp.lt.s32.totalorder %s23, 4
      // Predicated region
      $region61: #{tpu_custom_call.1} parent=5 // pred_check
        %p387 = pneg %p386
      $region62: #{tpu_custom_call.1} parent=5 // pred_check_branch
        %389 = sbr.rel (%p387) target = $region64
      $region63: #{tpu_custom_call.1} parent=5 // pred_region
        // Predicated region
        $region65: #{tpu_custom_call.1} parent=63 // pred_check
          %p390 = pneg %p43
        $region66: #{tpu_custom_call.1} parent=63 // pred_check_branch
          %392 = sbr.rel (%p390) target = $region68
        $region67: #{tpu_custom_call.1} parent=63 // pred_region
          %p393 = scmp.lt.s32.totalorder %s23, 3
          %s394 = scalar_select %p393, %s23, 3
          %s395 = smul.addr %s394, 3
          %s396 = smul.addr %s395, 4
          %s397 = scalar_lea.vmem %s0, %s396
        $region68: #{tpu_custom_call.1} parent=63 // pred_fallthru
          _
      $region64: #{tpu_custom_call.1} parent=5 // pred_fallthru
        _
      %p398 = scmp.le.s32.totalorder 1, %s23
      %p399 = scmp.lt.s32.totalorder %s23, 5
      %p400 = pnand %p398, %p399
      %p401 = pneg %p400
      // Predicated region
      $region69: #{tpu_custom_call.1} parent=5 // pred_check
        _
      $region70: #{tpu_custom_call.1} parent=5 // pred_check_branch
        %403 = sbr.rel (%p400) target = $region72
      $region71: #{tpu_custom_call.1} parent=5 // pred_region
        %s404 = ssub.s32 %s23, 1
        // Predicated region
        $region73: #{tpu_custom_call.1} parent=71 // pred_check
          %p405 = pneg %p91
        $region74: #{tpu_custom_call.1} parent=71 // pred_check_branch
          %407 = sbr.rel (%p405) target = $region76
        $region75: #{tpu_custom_call.1} parent=71 // pred_region
          %408 = dma.done [#allocation4], 48
        $region76: #{tpu_custom_call.1} parent=71 // pred_fallthru
          _
        %p409 = scmp.lt.s32.totalorder %s28, 3
        %s410 = scalar_select %p409, %s28, 3
        %s411 = smul.addr %s410, 3
        %s412 = smul.addr %s411, 4
        %s413 = scalar_lea.vmem %s0, %s412
        %p414 = pneg %p49
        %p415 = pneg %p46
        %p416 = pneg %p70
        %p417 = pneg %p67
        %p418 = pneg %p91
        %p419 = pneg %p88
        %p420 = pneg %p112
        %p421 = pneg %p109
        %p422 = pneg %p133
        %p423 = pneg %p130
        %p424 = pneg %p154
        %p425 = pneg %p151
        %p426 = pneg %p175
        %p427 = pneg %p172
        %p428 = pneg %p196
        %p429 = pneg %p193
        %p430 = pneg %p217
        %p431 = pneg %p214
        %p432 = pneg %p238
        %p433 = pneg %p235
        %p434 = pneg %p259
        %p435 = pneg %p256
        %p436 = pneg %p280
        %p437 = pneg %p277
        %p438 = pneg %p301
        %p439 = pneg %p298
        %p440 = pneg %p327
        %p441 = pneg %p324
        %s442 = sand.u32 %s314, 1
        %s443 = scalar_lea.sflag [#allocation5], %s442
        %s444 = sand.u32 %s314, 1
        %s445 = smul.addr %s444, 12
        %s446 = scalar_lea.vmem [#allocation6], %s445
        %p447 = scmp.lt.s32.totalorder %s28, 3
        %s448 = scalar_select %p447, %s28, 3
        %s449 = smul.addr %s448, 3
        %s450 = smul.addr %s449, 4
        %s451 = scalar_lea.vmem %s0, %s450
        %v452 = vld [vmem:[%s3] sm:$0xff]
        %v453 = vld [vmem:[%s451] sm:$0xff]
        %v454 = vld [vmem:[%s451 + $0x8] sm:$0xf]
        %v455 = vld [vmem:[%s4] sm:$0xff]
        %457 = vset.pattern.permute.xlu0 0
        %458 = vperm.xlu0 %457, %v455
        %v459 = vpop.permute.xlu0 %458
        %v463 = vcombine.high %v453, %v453
        %vm464 = vcmask 31744
        %v466 = vsel %vm464, %v452, 0
        %vm468 = vcmask 1043456
        %v469 = vsel %vm468, %v453, 0
        %v471 = vsel %vm468, %v463, 0
        %v473 = vsel %vm468, %v454, 0
        %475 = vmatprep.subr.mxu0 0.0
        %476 = vmatpush1.msra.mxu0 0.0
        %477 = vmatprep.subr.mxu0 0.0
        %478 = vmatpush1.msra.mxu0 0.0
        %479 = vmatprep.subr.mxu0 0.0
        %480 = vmatpush1.msra.mxu0 0.0
        %481 = vmatprep.subr.mxu0 0.0
        %482 = vmatpush1.msra.mxu0 0.0
        %483 = vmatprep.subr.mxu0 0.0
        %484 = vmatpush1.msra.mxu0 0.0
        %485 = vmatprep.subr.mxu0 0.0
        %486 = vmatpush1.msra.mxu0 0.0
        %487 = vmatprep.subr.mxu0 0.0
        %488 = vmatpush1.msra.mxu0 0.0
        %489 = vmatprep.subr.mxu0 0.0
        %490 = vmatpush1.msra.mxu0 0.0
        %491 = vmatprep.subr.mxu0 0.0
        %492 = vmatpush1.msra.mxu0 0.0
        %493 = vmatprep.subr.mxu0 0.0
        %494 = vmatpush1.msra.mxu0 0.0
        %495 = vmatprep.subr.mxu0 0.0
        %496 = vmatpush1.msra.mxu0 0.0
        %497 = vmatprep.subr.mxu0 0.0
        %498 = vmatpush1.msra.mxu0 0.0
        %499 = vmatprep.subr.mxu0 0.0
        %500 = vmatpush1.msra.mxu0 0.0
        %501 = vmatprep.subr.mxu0 0.0
        %502 = vmatpush1.msra.mxu0 0.0
        %503 = vmatprep.subr.mxu0 0.0
        %504 = vmatpush1.msra.mxu0 0.0
        %v505 = vand.u32 %v471, 4294901760
        %506 = vmatprep.subr.mxu0 %v505
        %v507 = vand.u32 %v469, 4294901760
        %508 = vmatpush1.msra.mxu0 %v507
        %509 = vmatprep.subr.mxu0 0.0
        %510 = vmatpush2.msra.mxu0 0.0
        %511 = vmatprep.subr.mxu0 0.0
        %512 = vmatpush2.msra.mxu0 0.0
        %513 = vmatprep.subr.mxu0 0.0
        %514 = vmatpush2.msra.mxu0 0.0
        %515 = vmatprep.subr.mxu0 0.0
        %516 = vmatpush2.msra.mxu0 0.0
        %517 = vmatprep.subr.mxu0 0.0
        %518 = vmatpush2.msra.mxu0 0.0
        %519 = vmatprep.subr.mxu0 0.0
        %520 = vmatpush2.msra.mxu0 0.0
        %521 = vmatprep.subr.mxu0 0.0
        %522 = vmatpush2.msra.mxu0 0.0
        %523 = vmatprep.subr.mxu0 0.0
        %524 = vmatpush2.msra.mxu0 0.0
        %525 = vmatprep.subr.mxu0 0.0
        %526 = vmatpush2.msra.mxu0 0.0
        %527 = vmatprep.subr.mxu0 0.0
        %528 = vmatpush2.msra.mxu0 0.0
        %529 = vmatprep.subr.mxu0 0.0
        %530 = vmatpush2.msra.mxu0 0.0
        %531 = vmatprep.subr.mxu0 0.0
        %532 = vmatpush2.msra.mxu0 0.0
        %533 = vmatprep.subr.mxu0 0.0
        %534 = vmatpush2.msra.mxu0 0.0
        %535 = vmatprep.subr.mxu0 0.0
        %536 = vmatpush2.msra.mxu0 0.0
        %537 = vmatprep.subr.mxu0 0.0
        %538 = vmatpush2.msra.mxu0 0.0
        %539 = vmatprep.subr.mxu0 0.0
        %540 = vmatpush2.msra.mxu0 0.0
        %541 = vmatprep.mubr.f32.mxu0 0.0
        %v542 = vand.u32 %v466, 4294901760
        %v543 = vsub.f32 %v466, %v542
        %v544 = vand.u32 %v543, 4294901760
        %v545 = vsub.f32 %v543, %v544
        %v546 = vand.u32 %v545, 4294901760
        %547 = vmatmul.mubr.f32.gmra.mxu0 %v546
        %v548 = vpop.f32.mrf.mxu0
        %v549 = vadd.f32 %v459, %v548
        %v550 = vpop.f32.mrf.mxu0
        %v551 = vadd.f32 %v459, %v550
        %552 = vdwg.mxu0
        %553 = vmatprep.subr.mxu0 0.0
        %554 = vmatpush1.msra.mxu0 0.0
        %555 = vmatprep.subr.mxu0 0.0
        %556 = vmatpush1.msra.mxu0 0.0
        %557 = vmatprep.subr.mxu0 0.0
        %558 = vmatpush1.msra.mxu0 0.0
        %559 = vmatprep.subr.mxu0 0.0
        %560 = vmatpush1.msra.mxu0 0.0
        %561 = vmatprep.subr.mxu0 0.0
        %562 = vmatpush1.msra.mxu0 0.0
        %563 = vmatprep.subr.mxu0 0.0
        %564 = vmatpush1.msra.mxu0 0.0
        %565 = vmatprep.subr.mxu0 0.0
        %566 = vmatpush1.msra.mxu0 0.0
        %567 = vmatprep.subr.mxu0 0.0
        %568 = vmatpush1.msra.mxu0 0.0
        %569 = vmatprep.subr.mxu0 0.0
        %570 = vmatpush1.msra.mxu0 0.0
        %571 = vmatprep.subr.mxu0 0.0
        %572 = vmatpush1.msra.mxu0 0.0
        %573 = vmatprep.subr.mxu0 0.0
        %574 = vmatpush1.msra.mxu0 0.0
        %575 = vmatprep.subr.mxu0 0.0
        %576 = vmatpush1.msra.mxu0 0.0
        %577 = vmatprep.subr.mxu0 0.0
        %578 = vmatpush1.msra.mxu0 0.0
        %579 = vmatprep.subr.mxu0 0.0
        %580 = vmatpush1.msra.mxu0 0.0
        %581 = vmatprep.subr.mxu0 0.0
        %582 = vmatpush1.msra.mxu0 0.0
        %v583 = vand.u32 %v471, 4294901760
        %v584 = vsub.f32 %v471, %v583
        %v585 = vand.u32 %v584, 4294901760
        %v586 = vsub.f32 %v584, %v585
        %v587 = vand.u32 %v586, 4294901760
        %588 = vmatprep.subr.mxu0 %v587
        %v589 = vand.u32 %v469, 4294901760
        %v590 = vsub.f32 %v469, %v589
        %v591 = vand.u32 %v590, 4294901760
        %v592 = vsub.f32 %v590, %v591
        %v593 = vand.u32 %v592, 4294901760
        %594 = vmatpush1.msra.mxu0 %v593
        %595 = vmatprep.subr.mxu0 0.0
        %596 = vmatpush2.msra.mxu0 0.0
        %597 = vmatprep.subr.mxu0 0.0
        %598 = vmatpush2.msra.mxu0 0.0
        %599 = vmatprep.subr.mxu0 0.0
        %600 = vmatpush2.msra.mxu0 0.0
        %601 = vmatprep.subr.mxu0 0.0
        %602 = vmatpush2.msra.mxu0 0.0
        %603 = vmatprep.subr.mxu0 0.0
        %604 = vmatpush2.msra.mxu0 0.0
        %605 = vmatprep.subr.mxu0 0.0
        %606 = vmatpush2.msra.mxu0 0.0
        %607 = vmatprep.subr.mxu0 0.0
        %608 = vmatpush2.msra.mxu0 0.0
        %609 = vmatprep.subr.mxu0 0.0
        %610 = vmatpush2.msra.mxu0 0.0
        %611 = vmatprep.subr.mxu0 0.0
        %612 = vmatpush2.msra.mxu0 0.0
        %613 = vmatprep.subr.mxu0 0.0
        %614 = vmatpush2.msra.mxu0 0.0
        %615 = vmatprep.subr.mxu0 0.0
        %616 = vmatpush2.msra.mxu0 0.0
        %617 = vmatprep.subr.mxu0 0.0
        %618 = vmatpush2.msra.mxu0 0.0
        %619 = vmatprep.subr.mxu0 0.0
        %620 = vmatpush2.msra.mxu0 0.0
        %621 = vmatprep.subr.mxu0 0.0
        %622 = vmatpush2.msra.mxu0 0.0
        %623 = vmatprep.subr.mxu0 0.0
        %624 = vmatpush2.msra.mxu0 0.0
        %625 = vmatprep.subr.mxu0 0.0
        %626 = vmatpush2.msra.mxu0 0.0
        %627 = vmatprep.mubr.f32.mxu0 0.0
        %v628 = vand.u32 %v466, 4294901760
        %629 = vmatmul.mubr.f32.gmra.mxu0 %v628
        %v630 = vpop.f32.mrf.mxu0
        %v631 = vadd.f32 %v549, %v630
        %v632 = vpop.f32.mrf.mxu0
        %v633 = vadd.f32 %v551, %v632
        %634 = vdwg.mxu0
        %635 = vmatprep.subr.mxu0 0.0
        %636 = vmatpush1.msra.mxu0 0.0
        %637 = vmatprep.subr.mxu0 0.0
        %638 = vmatpush1.msra.mxu0 0.0
        %639 = vmatprep.subr.mxu0 0.0
        %640 = vmatpush1.msra.mxu0 0.0
        %641 = vmatprep.subr.mxu0 0.0
        %642 = vmatpush1.msra.mxu0 0.0
        %643 = vmatprep.subr.mxu0 0.0
        %644 = vmatpush1.msra.mxu0 0.0
        %645 = vmatprep.subr.mxu0 0.0
        %646 = vmatpush1.msra.mxu0 0.0
        %647 = vmatprep.subr.mxu0 0.0
        %648 = vmatpush1.msra.mxu0 0.0
        %649 = vmatprep.subr.mxu0 0.0
        %650 = vmatpush1.msra.mxu0 0.0
        %651 = vmatprep.subr.mxu0 0.0
        %652 = vmatpush1.msra.mxu0 0.0
        %653 = vmatprep.subr.mxu0 0.0
        %654 = vmatpush1.msra.mxu0 0.0
        %655 = vmatprep.subr.mxu0 0.0
        %656 = vmatpush1.msra.mxu0 0.0
        %657 = vmatprep.subr.mxu0 0.0
        %658 = vmatpush1.msra.mxu0 0.0
        %659 = vmatprep.subr.mxu0 0.0
        %660 = vmatpush1.msra.mxu0 0.0
        %661 = vmatprep.subr.mxu0 0.0
        %662 = vmatpush1.msra.mxu0 0.0
        %663 = vmatprep.subr.mxu0 0.0
        %664 = vmatpush1.msra.mxu0 0.0
        %v665 = vand.u32 %v471, 4294901760
        %v666 = vsub.f32 %v471, %v665
        %667 = vmatprep.subr.mxu0 %v666
        %v668 = vand.u32 %v469, 4294901760
        %v669 = vsub.f32 %v469, %v668
        %670 = vmatpush1.msra.mxu0 %v669
        %671 = vmatprep.subr.mxu0 0.0
        %672 = vmatpush2.msra.mxu0 0.0
        %673 = vmatprep.subr.mxu0 0.0
        %674 = vmatpush2.msra.mxu0 0.0
        %675 = vmatprep.subr.mxu0 0.0
        %676 = vmatpush2.msra.mxu0 0.0
        %677 = vmatprep.subr.mxu0 0.0
        %678 = vmatpush2.msra.mxu0 0.0
        %679 = vmatprep.subr.mxu0 0.0
        %680 = vmatpush2.msra.mxu0 0.0
        %681 = vmatprep.subr.mxu0 0.0
        %682 = vmatpush2.msra.mxu0 0.0
        %683 = vmatprep.subr.mxu0 0.0
        %684 = vmatpush2.msra.mxu0 0.0
        %685 = vmatprep.subr.mxu0 0.0
        %686 = vmatpush2.msra.mxu0 0.0
        %687 = vmatprep.subr.mxu0 0.0
        %688 = vmatpush2.msra.mxu0 0.0
        %689 = vmatprep.subr.mxu0 0.0
        %690 = vmatpush2.msra.mxu0 0.0
        %691 = vmatprep.subr.mxu0 0.0
        %692 = vmatpush2.msra.mxu0 0.0
        %693 = vmatprep.subr.mxu0 0.0
        %694 = vmatpush2.msra.mxu0 0.0
        %695 = vmatprep.subr.mxu0 0.0
        %696 = vmatpush2.msra.mxu0 0.0
        %697 = vmatprep.subr.mxu0 0.0
        %698 = vmatpush2.msra.mxu0 0.0
        %699 = vmatprep.subr.mxu0 0.0
        %700 = vmatpush2.msra.mxu0 0.0
        %701 = vmatprep.subr.mxu0 0.0
        %702 = vmatpush2.msra.mxu0 0.0
        %703 = vmatprep.mubr.f32.mxu0 0.0
        %v704 = vand.u32 %v466, 4294901760
        %v705 = vsub.f32 %v466, %v704
        %706 = vmatmul.mubr.f32.gmra.mxu0 %v705
        %v707 = vpop.f32.mrf.mxu0
        %v708 = vadd.f32 %v631, %v707
        %v709 = vpop.f32.mrf.mxu0
        %v710 = vadd.f32 %v633, %v709
        %711 = vdwg.mxu0
        %712 = vmatprep.subr.mxu0 0.0
        %713 = vmatpush1.msra.mxu0 0.0
        %714 = vmatprep.subr.mxu0 0.0
        %715 = vmatpush1.msra.mxu0 0.0
        %716 = vmatprep.subr.mxu0 0.0
        %717 = vmatpush1.msra.mxu0 0.0
        %718 = vmatprep.subr.mxu0 0.0
        %719 = vmatpush1.msra.mxu0 0.0
        %720 = vmatprep.subr.mxu0 0.0
        %721 = vmatpush1.msra.mxu0 0.0
        %722 = vmatprep.subr.mxu0 0.0
        %723 = vmatpush1.msra.mxu0 0.0
        %724 = vmatprep.subr.mxu0 0.0
        %725 = vmatpush1.msra.mxu0 0.0
        %726 = vmatprep.subr.mxu0 0.0
        %727 = vmatpush1.msra.mxu0 0.0
        %728 = vmatprep.subr.mxu0 0.0
        %729 = vmatpush1.msra.mxu0 0.0
        %730 = vmatprep.subr.mxu0 0.0
        %731 = vmatpush1.msra.mxu0 0.0
        %732 = vmatprep.subr.mxu0 0.0
        %733 = vmatpush1.msra.mxu0 0.0
        %734 = vmatprep.subr.mxu0 0.0
        %735 = vmatpush1.msra.mxu0 0.0
        %736 = vmatprep.subr.mxu0 0.0
        %737 = vmatpush1.msra.mxu0 0.0
        %738 = vmatprep.subr.mxu0 0.0
        %739 = vmatpush1.msra.mxu0 0.0
        %740 = vmatprep.subr.mxu0 0.0
        %741 = vmatpush1.msra.mxu0 0.0
        %v742 = vand.u32 %v471, 4294901760
        %743 = vmatprep.subr.mxu0 %v742
        %v744 = vand.u32 %v469, 4294901760
        %745 = vmatpush1.msra.mxu0 %v744
        %746 = vmatprep.subr.mxu0 0.0
        %747 = vmatpush2.msra.mxu0 0.0
        %748 = vmatprep.subr.mxu0 0.0
        %749 = vmatpush2.msra.mxu0 0.0
        %750 = vmatprep.subr.mxu0 0.0
        %751 = vmatpush2.msra.mxu0 0.0
        %752 = vmatprep.subr.mxu0 0.0
        %753 = vmatpush2.msra.mxu0 0.0
        %754 = vmatprep.subr.mxu0 0.0
        %755 = vmatpush2.msra.mxu0 0.0
        %756 = vmatprep.subr.mxu0 0.0
        %757 = vmatpush2.msra.mxu0 0.0
        %758 = vmatprep.subr.mxu0 0.0
        %759 = vmatpush2.msra.mxu0 0.0
        %760 = vmatprep.subr.mxu0 0.0
        %761 = vmatpush2.msra.mxu0 0.0
        %762 = vmatprep.subr.mxu0 0.0
        %763 = vmatpush2.msra.mxu0 0.0
        %764 = vmatprep.subr.mxu0 0.0
        %765 = vmatpush2.msra.mxu0 0.0
        %766 = vmatprep.subr.mxu0 0.0
        %767 = vmatpush2.msra.mxu0 0.0
        %768 = vmatprep.subr.mxu0 0.0
        %769 = vmatpush2.msra.mxu0 0.0
        %770 = vmatprep.subr.mxu0 0.0
        %771 = vmatpush2.msra.mxu0 0.0
        %772 = vmatprep.subr.mxu0 0.0
        %773 = vmatpush2.msra.mxu0 0.0
        %774 = vmatprep.subr.mxu0 0.0
        %775 = vmatpush2.msra.mxu0 0.0
        %776 = vmatprep.subr.mxu0 0.0
        %777 = vmatpush2.msra.mxu0 0.0
        %778 = vmatprep.mubr.f32.mxu0 0.0
        %v779 = vand.u32 %v466, 4294901760
        %v780 = vsub.f32 %v466, %v779
        %v781 = vand.u32 %v780, 4294901760
        %782 = vmatmul.mubr.f32.gmra.mxu0 %v781
        %v783 = vpop.f32.mrf.mxu0
        %v784 = vadd.f32 %v708, %v783
        %v785 = vpop.f32.mrf.mxu0
        %v786 = vadd.f32 %v710, %v785
        %787 = vdwg.mxu0
        %788 = vmatprep.subr.mxu0 0.0
        %789 = vmatpush1.msra.mxu0 0.0
        %790 = vmatprep.subr.mxu0 0.0
        %791 = vmatpush1.msra.mxu0 0.0
        %792 = vmatprep.subr.mxu0 0.0
        %793 = vmatpush1.msra.mxu0 0.0
        %794 = vmatprep.subr.mxu0 0.0
        %795 = vmatpush1.msra.mxu0 0.0
        %796 = vmatprep.subr.mxu0 0.0
        %797 = vmatpush1.msra.mxu0 0.0
        %798 = vmatprep.subr.mxu0 0.0
        %799 = vmatpush1.msra.mxu0 0.0
        %800 = vmatprep.subr.mxu0 0.0
        %801 = vmatpush1.msra.mxu0 0.0
        %802 = vmatprep.subr.mxu0 0.0
        %803 = vmatpush1.msra.mxu0 0.0
        %804 = vmatprep.subr.mxu0 0.0
        %805 = vmatpush1.msra.mxu0 0.0
        %806 = vmatprep.subr.mxu0 0.0
        %807 = vmatpush1.msra.mxu0 0.0
        %808 = vmatprep.subr.mxu0 0.0
        %809 = vmatpush1.msra.mxu0 0.0
        %810 = vmatprep.subr.mxu0 0.0
        %811 = vmatpush1.msra.mxu0 0.0
        %812 = vmatprep.subr.mxu0 0.0
        %813 = vmatpush1.msra.mxu0 0.0
        %814 = vmatprep.subr.mxu0 0.0
        %815 = vmatpush1.msra.mxu0 0.0
        %816 = vmatprep.subr.mxu0 0.0
        %817 = vmatpush1.msra.mxu0 0.0
        %v818 = vand.u32 %v471, 4294901760
        %v819 = vsub.f32 %v471, %v818
        %v820 = vand.u32 %v819, 4294901760
        %821 = vmatprep.subr.mxu0 %v820
        %v822 = vand.u32 %v469, 4294901760
        %v823 = vsub.f32 %v469, %v822
        %v824 = vand.u32 %v823, 4294901760
        %825 = vmatpush1.msra.mxu0 %v824
        %826 = vmatprep.subr.mxu0 0.0
        %827 = vmatpush2.msra.mxu0 0.0
        %828 = vmatprep.subr.mxu0 0.0
        %829 = vmatpush2.msra.mxu0 0.0
        %830 = vmatprep.subr.mxu0 0.0
        %831 = vmatpush2.msra.mxu0 0.0
        %832 = vmatprep.subr.mxu0 0.0
        %833 = vmatpush2.msra.mxu0 0.0
        %834 = vmatprep.subr.mxu0 0.0
        %835 = vmatpush2.msra.mxu0 0.0
        %836 = vmatprep.subr.mxu0 0.0
        %837 = vmatpush2.msra.mxu0 0.0
        %838 = vmatprep.subr.mxu0 0.0
        %839 = vmatpush2.msra.mxu0 0.0
        %840 = vmatprep.subr.mxu0 0.0
        %841 = vmatpush2.msra.mxu0 0.0
        %842 = vmatprep.subr.mxu0 0.0
        %843 = vmatpush2.msra.mxu0 0.0
        %844 = vmatprep.subr.mxu0 0.0
        %845 = vmatpush2.msra.mxu0 0.0
        %846 = vmatprep.subr.mxu0 0.0
        %847 = vmatpush2.msra.mxu0 0.0
        %848 = vmatprep.subr.mxu0 0.0
        %849 = vmatpush2.msra.mxu0 0.0
        %850 = vmatprep.subr.mxu0 0.0
        %851 = vmatpush2.msra.mxu0 0.0
        %852 = vmatprep.subr.mxu0 0.0
        %853 = vmatpush2.msra.mxu0 0.0
        %854 = vmatprep.subr.mxu0 0.0
        %855 = vmatpush2.msra.mxu0 0.0
        %856 = vmatprep.subr.mxu0 0.0
        %857 = vmatpush2.msra.mxu0 0.0
        %858 = vmatprep.mubr.f32.mxu0 0.0
        %v859 = vand.u32 %v466, 4294901760
        %860 = vmatmul.mubr.f32.gmra.mxu0 %v859
        %v861 = vpop.f32.mrf.mxu0
        %v862 = vadd.f32 %v784, %v861
        %v863 = vpop.f32.mrf.mxu0
        %v864 = vadd.f32 %v786, %v863
        %865 = vdwg.mxu0
        %866 = vmatprep.subr.mxu0 0.0
        %867 = vmatpush1.msra.mxu0 0.0
        %868 = vmatprep.subr.mxu0 0.0
        %869 = vmatpush1.msra.mxu0 0.0
        %870 = vmatprep.subr.mxu0 0.0
        %871 = vmatpush1.msra.mxu0 0.0
        %872 = vmatprep.subr.mxu0 0.0
        %873 = vmatpush1.msra.mxu0 0.0
        %874 = vmatprep.subr.mxu0 0.0
        %875 = vmatpush1.msra.mxu0 0.0
        %876 = vmatprep.subr.mxu0 0.0
        %877 = vmatpush1.msra.mxu0 0.0
        %878 = vmatprep.subr.mxu0 0.0
        %879 = vmatpush1.msra.mxu0 0.0
        %880 = vmatprep.subr.mxu0 0.0
        %881 = vmatpush1.msra.mxu0 0.0
        %882 = vmatprep.subr.mxu0 0.0
        %883 = vmatpush1.msra.mxu0 0.0
        %884 = vmatprep.subr.mxu0 0.0
        %885 = vmatpush1.msra.mxu0 0.0
        %886 = vmatprep.subr.mxu0 0.0
        %887 = vmatpush1.msra.mxu0 0.0
        %888 = vmatprep.subr.mxu0 0.0
        %889 = vmatpush1.msra.mxu0 0.0
        %890 = vmatprep.subr.mxu0 0.0
        %891 = vmatpush1.msra.mxu0 0.0
        %892 = vmatprep.subr.mxu0 0.0
        %893 = vmatpush1.msra.mxu0 0.0
        %894 = vmatprep.subr.mxu0 0.0
        %895 = vmatpush1.msra.mxu0 0.0
        %v896 = vand.u32 %v471, 4294901760
        %897 = vmatprep.subr.mxu0 %v896
        %v898 = vand.u32 %v469, 4294901760
        %899 = vmatpush1.msra.mxu0 %v898
        %900 = vmatprep.subr.mxu0 0.0
        %901 = vmatpush2.msra.mxu0 0.0
        %902 = vmatprep.subr.mxu0 0.0
        %903 = vmatpush2.msra.mxu0 0.0
        %904 = vmatprep.subr.mxu0 0.0
        %905 = vmatpush2.msra.mxu0 0.0
        %906 = vmatprep.subr.mxu0 0.0
        %907 = vmatpush2.msra.mxu0 0.0
        %908 = vmatprep.subr.mxu0 0.0
        %909 = vmatpush2.msra.mxu0 0.0
        %910 = vmatprep.subr.mxu0 0.0
        %911 = vmatpush2.msra.mxu0 0.0
        %912 = vmatprep.subr.mxu0 0.0
        %913 = vmatpush2.msra.mxu0 0.0
        %914 = vmatprep.subr.mxu0 0.0
        %915 = vmatpush2.msra.mxu0 0.0
        %916 = vmatprep.subr.mxu0 0.0
        %917 = vmatpush2.msra.mxu0 0.0
        %918 = vmatprep.subr.mxu0 0.0
        %919 = vmatpush2.msra.mxu0 0.0
        %920 = vmatprep.subr.mxu0 0.0
        %921 = vmatpush2.msra.mxu0 0.0
        %922 = vmatprep.subr.mxu0 0.0
        %923 = vmatpush2.msra.mxu0 0.0
        %924 = vmatprep.subr.mxu0 0.0
        %925 = vmatpush2.msra.mxu0 0.0
        %926 = vmatprep.subr.mxu0 0.0
        %927 = vmatpush2.msra.mxu0 0.0
        %928 = vmatprep.subr.mxu0 0.0
        %929 = vmatpush2.msra.mxu0 0.0
        %930 = vmatprep.subr.mxu0 0.0
        %931 = vmatpush2.msra.mxu0 0.0
        %932 = vmatprep.mubr.f32.mxu0 0.0
        %v933 = vand.u32 %v466, 4294901760
        %934 = vmatmul.mubr.f32.gmra.mxu0 %v933
        %v935 = vpop.f32.mrf.mxu0
        %v936 = vadd.f32 %v862, %v935
        %v937 = vpop.f32.mrf.mxu0
        %v938 = vadd.f32 %v864, %v937
        %939 = vdwg.mxu0
        %940 = vmatprep.subr.mxu0 0.0
        %941 = vmatpush1.msra.mxu0 0.0
        %942 = vmatprep.subr.mxu0 0.0
        %943 = vmatpush1.msra.mxu0 0.0
        %944 = vmatprep.subr.mxu0 0.0
        %945 = vmatpush1.msra.mxu0 0.0
        %946 = vmatprep.subr.mxu0 0.0
        %947 = vmatpush1.msra.mxu0 0.0
        %948 = vmatprep.subr.mxu0 0.0
        %949 = vmatpush1.msra.mxu0 0.0
        %950 = vmatprep.subr.mxu0 0.0
        %951 = vmatpush1.msra.mxu0 0.0
        %952 = vmatprep.subr.mxu0 0.0
        %953 = vmatpush1.msra.mxu0 0.0
        %954 = vmatprep.subr.mxu0 0.0
        %955 = vmatpush1.msra.mxu0 0.0
        %956 = vmatprep.subr.mxu0 0.0
        %957 = vmatpush1.msra.mxu0 0.0
        %958 = vmatprep.subr.mxu0 0.0
        %959 = vmatpush1.msra.mxu0 0.0
        %960 = vmatprep.subr.mxu0 0.0
        %961 = vmatpush1.msra.mxu0 0.0
        %962 = vmatprep.subr.mxu0 0.0
        %963 = vmatpush1.msra.mxu0 0.0
        %964 = vmatprep.subr.mxu0 0.0
        %965 = vmatpush1.msra.mxu0 0.0
        %966 = vmatprep.subr.mxu0 0.0
        %967 = vmatpush1.msra.mxu0 0.0
        %968 = vmatprep.subr.mxu0 0.0
        %969 = vmatpush1.msra.mxu0 0.0
        %970 = vmatprep.subr.mxu0 0.0
        %v971 = vand.u32 %v473, 4294901760
        %972 = vmatpush1.msra.mxu0 %v971
        %973 = vmatprep.subr.mxu0 0.0
        %974 = vmatpush2.msra.mxu0 0.0
        %975 = vmatprep.subr.mxu0 0.0
        %976 = vmatpush2.msra.mxu0 0.0
        %977 = vmatprep.subr.mxu0 0.0
        %978 = vmatpush2.msra.mxu0 0.0
        %979 = vmatprep.subr.mxu0 0.0
        %980 = vmatpush2.msra.mxu0 0.0
        %981 = vmatprep.subr.mxu0 0.0
        %982 = vmatpush2.msra.mxu0 0.0
        %983 = vmatprep.subr.mxu0 0.0
        %984 = vmatpush2.msra.mxu0 0.0
        %985 = vmatprep.subr.mxu0 0.0
        %986 = vmatpush2.msra.mxu0 0.0
        %987 = vmatprep.subr.mxu0 0.0
        %988 = vmatpush2.msra.mxu0 0.0
        %989 = vmatprep.subr.mxu0 0.0
        %990 = vmatpush2.msra.mxu0 0.0
        %991 = vmatprep.subr.mxu0 0.0
        %992 = vmatpush2.msra.mxu0 0.0
        %993 = vmatprep.subr.mxu0 0.0
        %994 = vmatpush2.msra.mxu0 0.0
        %995 = vmatprep.subr.mxu0 0.0
        %996 = vmatpush2.msra.mxu0 0.0
        %997 = vmatprep.subr.mxu0 0.0
        %998 = vmatpush2.msra.mxu0 0.0
        %999 = vmatprep.subr.mxu0 0.0
        %1000 = vmatpush2.msra.mxu0 0.0
        %1001 = vmatprep.subr.mxu0 0.0
        %1002 = vmatpush2.msra.mxu0 0.0
        %1003 = vmatprep.subr.mxu0 0.0
        %1004 = vmatpush2.msra.mxu0 0.0
        %1005 = vmatprep.mubr.f32.mxu0 0.0
        %v1006 = vand.u32 %v466, 4294901760
        %v1007 = vsub.f32 %v466, %v1006
        %v1008 = vand.u32 %v1007, 4294901760
        %v1009 = vsub.f32 %v1007, %v1008
        %v1010 = vand.u32 %v1009, 4294901760
        %1011 = vmatmul.mubr.f32.gmra.mxu0 %v1010
        %v1012 = vpop.f32.mrf.mxu0
        %v1013 = vadd.f32 %v459, %v1012
        %v1014 = vpop.f32.mrf.mxu0
        %1015 = vdwg.mxu0
        %1016 = vmatprep.subr.mxu0 0.0
        %1017 = vmatpush1.msra.mxu0 0.0
        %1018 = vmatprep.subr.mxu0 0.0
        %1019 = vmatpush1.msra.mxu0 0.0
        %1020 = vmatprep.subr.mxu0 0.0
        %1021 = vmatpush1.msra.mxu0 0.0
        %1022 = vmatprep.subr.mxu0 0.0
        %1023 = vmatpush1.msra.mxu0 0.0
        %1024 = vmatprep.subr.mxu0 0.0
        %1025 = vmatpush1.msra.mxu0 0.0
        %1026 = vmatprep.subr.mxu0 0.0
        %1027 = vmatpush1.msra.mxu0 0.0
        %1028 = vmatprep.subr.mxu0 0.0
        %1029 = vmatpush1.msra.mxu0 0.0
        %1030 = vmatprep.subr.mxu0 0.0
        %1031 = vmatpush1.msra.mxu0 0.0
        %1032 = vmatprep.subr.mxu0 0.0
        %1033 = vmatpush1.msra.mxu0 0.0
        %1034 = vmatprep.subr.mxu0 0.0
        %1035 = vmatpush1.msra.mxu0 0.0
        %1036 = vmatprep.subr.mxu0 0.0
        %1037 = vmatpush1.msra.mxu0 0.0
        %1038 = vmatprep.subr.mxu0 0.0
        %1039 = vmatpush1.msra.mxu0 0.0
        %1040 = vmatprep.subr.mxu0 0.0
        %1041 = vmatpush1.msra.mxu0 0.0
        %1042 = vmatprep.subr.mxu0 0.0
        %1043 = vmatpush1.msra.mxu0 0.0
        %1044 = vmatprep.subr.mxu0 0.0
        %1045 = vmatpush1.msra.mxu0 0.0
        %1046 = vmatprep.subr.mxu0 0.0
        %v1047 = vand.u32 %v473, 4294901760
        %v1048 = vsub.f32 %v473, %v1047
        %v1049 = vand.u32 %v1048, 4294901760
        %v1050 = vsub.f32 %v1048, %v1049
        %v1051 = vand.u32 %v1050, 4294901760
        %1052 = vmatpush1.msra.mxu0 %v1051
        %1053 = vmatprep.subr.mxu0 0.0
        %1054 = vmatpush2.msra.mxu0 0.0
        %1055 = vmatprep.subr.mxu0 0.0
        %1056 = vmatpush2.msra.mxu0 0.0
        %1057 = vmatprep.subr.mxu0 0.0
        %1058 = vmatpush2.msra.mxu0 0.0
        %1059 = vmatprep.subr.mxu0 0.0
        %1060 = vmatpush2.msra.mxu0 0.0
        %1061 = vmatprep.subr.mxu0 0.0
        %1062 = vmatpush2.msra.mxu0 0.0
        %1063 = vmatprep.subr.mxu0 0.0
        %1064 = vmatpush2.msra.mxu0 0.0
        %1065 = vmatprep.subr.mxu0 0.0
        %1066 = vmatpush2.msra.mxu0 0.0
        %1067 = vmatprep.subr.mxu0 0.0
        %1068 = vmatpush2.msra.mxu0 0.0
        %1069 = vmatprep.subr.mxu0 0.0
        %1070 = vmatpush2.msra.mxu0 0.0
        %1071 = vmatprep.subr.mxu0 0.0
        %1072 = vmatpush2.msra.mxu0 0.0
        %1073 = vmatprep.subr.mxu0 0.0
        %1074 = vmatpush2.msra.mxu0 0.0
        %1075 = vmatprep.subr.mxu0 0.0
        %1076 = vmatpush2.msra.mxu0 0.0
        %1077 = vmatprep.subr.mxu0 0.0
        %1078 = vmatpush2.msra.mxu0 0.0
        %1079 = vmatprep.subr.mxu0 0.0
        %1080 = vmatpush2.msra.mxu0 0.0
        %1081 = vmatprep.subr.mxu0 0.0
        %1082 = vmatpush2.msra.mxu0 0.0
        %1083 = vmatprep.subr.mxu0 0.0
        %1084 = vmatpush2.msra.mxu0 0.0
        %1085 = vmatprep.mubr.f32.mxu0 0.0
        %v1086 = vand.u32 %v466, 4294901760
        %1087 = vmatmul.mubr.f32.gmra.mxu0 %v1086
        %v1088 = vpop.f32.mrf.mxu0
        %v1089 = vadd.f32 %v1013, %v1088
        %v1090 = vpop.f32.mrf.mxu0
        %1091 = vdwg.mxu0
        %1092 = vmatprep.subr.mxu0 0.0
        %1093 = vmatpush1.msra.mxu0 0.0
        %1094 = vmatprep.subr.mxu0 0.0
        %1095 = vmatpush1.msra.mxu0 0.0
        %1096 = vmatprep.subr.mxu0 0.0
        %1097 = vmatpush1.msra.mxu0 0.0
        %1098 = vmatprep.subr.mxu0 0.0
        %1099 = vmatpush1.msra.mxu0 0.0
        %1100 = vmatprep.subr.mxu0 0.0
        %1101 = vmatpush1.msra.mxu0 0.0
        %1102 = vmatprep.subr.mxu0 0.0
        %1103 = vmatpush1.msra.mxu0 0.0
        %1104 = vmatprep.subr.mxu0 0.0
        %1105 = vmatpush1.msra.mxu0 0.0
        %1106 = vmatprep.subr.mxu0 0.0
        %1107 = vmatpush1.msra.mxu0 0.0
        %1108 = vmatprep.subr.mxu0 0.0
        %1109 = vmatpush1.msra.mxu0 0.0
        %1110 = vmatprep.subr.mxu0 0.0
        %1111 = vmatpush1.msra.mxu0 0.0
        %1112 = vmatprep.subr.mxu0 0.0
        %1113 = vmatpush1.msra.mxu0 0.0
        %1114 = vmatprep.subr.mxu0 0.0
        %1115 = vmatpush1.msra.mxu0 0.0
        %1116 = vmatprep.subr.mxu0 0.0
        %1117 = vmatpush1.msra.mxu0 0.0
        %1118 = vmatprep.subr.mxu0 0.0
        %1119 = vmatpush1.msra.mxu0 0.0
        %1120 = vmatprep.subr.mxu0 0.0
        %1121 = vmatpush1.msra.mxu0 0.0
        %1122 = vmatprep.subr.mxu0 0.0
        %v1123 = vand.u32 %v473, 4294901760
        %v1124 = vsub.f32 %v473, %v1123
        %1125 = vmatpush1.msra.mxu0 %v1124
        %1126 = vmatprep.subr.mxu0 0.0
        %1127 = vmatpush2.msra.mxu0 0.0
        %1128 = vmatprep.subr.mxu0 0.0
        %1129 = vmatpush2.msra.mxu0 0.0
        %1130 = vmatprep.subr.mxu0 0.0
        %1131 = vmatpush2.msra.mxu0 0.0
        %1132 = vmatprep.subr.mxu0 0.0
        %1133 = vmatpush2.msra.mxu0 0.0
        %1134 = vmatprep.subr.mxu0 0.0
        %1135 = vmatpush2.msra.mxu0 0.0
        %1136 = vmatprep.subr.mxu0 0.0
        %1137 = vmatpush2.msra.mxu0 0.0
        %1138 = vmatprep.subr.mxu0 0.0
        %1139 = vmatpush2.msra.mxu0 0.0
        %1140 = vmatprep.subr.mxu0 0.0
        %1141 = vmatpush2.msra.mxu0 0.0
        %1142 = vmatprep.subr.mxu0 0.0
        %1143 = vmatpush2.msra.mxu0 0.0
        %1144 = vmatprep.subr.mxu0 0.0
        %1145 = vmatpush2.msra.mxu0 0.0
        %1146 = vmatprep.subr.mxu0 0.0
        %1147 = vmatpush2.msra.mxu0 0.0
        %1148 = vmatprep.subr.mxu0 0.0
        %1149 = vmatpush2.msra.mxu0 0.0
        %1150 = vmatprep.subr.mxu0 0.0
        %1151 = vmatpush2.msra.mxu0 0.0
        %1152 = vmatprep.subr.mxu0 0.0
        %1153 = vmatpush2.msra.mxu0 0.0
        %1154 = vmatprep.subr.mxu0 0.0
        %1155 = vmatpush2.msra.mxu0 0.0
        %1156 = vmatprep.subr.mxu0 0.0
        %1157 = vmatpush2.msra.mxu0 0.0
        %1158 = vmatprep.mubr.f32.mxu0 0.0
        %v1159 = vand.u32 %v466, 4294901760
        %v1160 = vsub.f32 %v466, %v1159
        %1161 = vmatmul.mubr.f32.gmra.mxu0 %v1160
        %v1162 = vpop.f32.mrf.mxu0
        %v1163 = vadd.f32 %v1089, %v1162
        %v1164 = vpop.f32.mrf.mxu0
        %1165 = vdwg.mxu0
        %1166 = vmatprep.subr.mxu0 0.0
        %1167 = vmatpush1.msra.mxu0 0.0
        %1168 = vmatprep.subr.mxu0 0.0
        %1169 = vmatpush1.msra.mxu0 0.0
        %1170 = vmatprep.subr.mxu0 0.0
        %1171 = vmatpush1.msra.mxu0 0.0
        %1172 = vmatprep.subr.mxu0 0.0
        %1173 = vmatpush1.msra.mxu0 0.0
        %1174 = vmatprep.subr.mxu0 0.0
        %1175 = vmatpush1.msra.mxu0 0.0
        %1176 = vmatprep.subr.mxu0 0.0
        %1177 = vmatpush1.msra.mxu0 0.0
        %1178 = vmatprep.subr.mxu0 0.0
        %1179 = vmatpush1.msra.mxu0 0.0
        %1180 = vmatprep.subr.mxu0 0.0
        %1181 = vmatpush1.msra.mxu0 0.0
        %1182 = vmatprep.subr.mxu0 0.0
        %1183 = vmatpush1.msra.mxu0 0.0
        %1184 = vmatprep.subr.mxu0 0.0
        %1185 = vmatpush1.msra.mxu0 0.0
        %1186 = vmatprep.subr.mxu0 0.0
        %1187 = vmatpush1.msra.mxu0 0.0
        %1188 = vmatprep.subr.mxu0 0.0
        %1189 = vmatpush1.msra.mxu0 0.0
        %1190 = vmatprep.subr.mxu0 0.0
        %1191 = vmatpush1.msra.mxu0 0.0
        %1192 = vmatprep.subr.mxu0 0.0
        %1193 = vmatpush1.msra.mxu0 0.0
        %1194 = vmatprep.subr.mxu0 0.0
        %1195 = vmatpush1.msra.mxu0 0.0
        %1196 = vmatprep.subr.mxu0 0.0
        %v1197 = vand.u32 %v473, 4294901760
        %1198 = vmatpush1.msra.mxu0 %v1197
        %1199 = vmatprep.subr.mxu0 0.0
        %1200 = vmatpush2.msra.mxu0 0.0
        %1201 = vmatprep.subr.mxu0 0.0
        %1202 = vmatpush2.msra.mxu0 0.0
        %1203 = vmatprep.subr.mxu0 0.0
        %1204 = vmatpush2.msra.mxu0 0.0
        %1205 = vmatprep.subr.mxu0 0.0
        %1206 = vmatpush2.msra.mxu0 0.0
        %1207 = vmatprep.subr.mxu0 0.0
        %1208 = vmatpush2.msra.mxu0 0.0
        %1209 = vmatprep.subr.mxu0 0.0
        %1210 = vmatpush2.msra.mxu0 0.0
        %1211 = vmatprep.subr.mxu0 0.0
        %1212 = vmatpush2.msra.mxu0 0.0
        %1213 = vmatprep.subr.mxu0 0.0
        %1214 = vmatpush2.msra.mxu0 0.0
        %1215 = vmatprep.subr.mxu0 0.0
        %1216 = vmatpush2.msra.mxu0 0.0
        %1217 = vmatprep.subr.mxu0 0.0
        %1218 = vmatpush2.msra.mxu0 0.0
        %1219 = vmatprep.subr.mxu0 0.0
        %1220 = vmatpush2.msra.mxu0 0.0
        %1221 = vmatprep.subr.mxu0 0.0
        %1222 = vmatpush2.msra.mxu0 0.0
        %1223 = vmatprep.subr.mxu0 0.0
        %1224 = vmatpush2.msra.mxu0 0.0
        %1225 = vmatprep.subr.mxu0 0.0
        %1226 = vmatpush2.msra.mxu0 0.0
        %1227 = vmatprep.subr.mxu0 0.0
        %1228 = vmatpush2.msra.mxu0 0.0
        %1229 = vmatprep.subr.mxu0 0.0
        %1230 = vmatpush2.msra.mxu0 0.0
        %1231 = vmatprep.mubr.f32.mxu0 0.0
        %v1232 = vand.u32 %v466, 4294901760
        %v1233 = vsub.f32 %v466, %v1232
        %v1234 = vand.u32 %v1233, 4294901760
        %1235 = vmatmul.mubr.f32.gmra.mxu0 %v1234
        %v1236 = vpop.f32.mrf.mxu0
        %v1237 = vadd.f32 %v1163, %v1236
        %v1238 = vpop.f32.mrf.mxu0
        %1239 = vdwg.mxu0
        %1240 = vmatprep.subr.mxu0 0.0
        %1241 = vmatpush1.msra.mxu0 0.0
        %1242 = vmatprep.subr.mxu0 0.0
        %1243 = vmatpush1.msra.mxu0 0.0
        %1244 = vmatprep.subr.mxu0 0.0
        %1245 = vmatpush1.msra.mxu0 0.0
        %1246 = vmatprep.subr.mxu0 0.0
        %1247 = vmatpush1.msra.mxu0 0.0
        %1248 = vmatprep.subr.mxu0 0.0
        %1249 = vmatpush1.msra.mxu0 0.0
        %1250 = vmatprep.subr.mxu0 0.0
        %1251 = vmatpush1.msra.mxu0 0.0
        %1252 = vmatprep.subr.mxu0 0.0
        %1253 = vmatpush1.msra.mxu0 0.0
        %1254 = vmatprep.subr.mxu0 0.0
        %1255 = vmatpush1.msra.mxu0 0.0
        %1256 = vmatprep.subr.mxu0 0.0
        %1257 = vmatpush1.msra.mxu0 0.0
        %1258 = vmatprep.subr.mxu0 0.0
        %1259 = vmatpush1.msra.mxu0 0.0
        %1260 = vmatprep.subr.mxu0 0.0
        %1261 = vmatpush1.msra.mxu0 0.0
        %1262 = vmatprep.subr.mxu0 0.0
        %1263 = vmatpush1.msra.mxu0 0.0
        %1264 = vmatprep.subr.mxu0 0.0
        %1265 = vmatpush1.msra.mxu0 0.0
        %1266 = vmatprep.subr.mxu0 0.0
        %1267 = vmatpush1.msra.mxu0 0.0
        %1268 = vmatprep.subr.mxu0 0.0
        %1269 = vmatpush1.msra.mxu0 0.0
        %1270 = vmatprep.subr.mxu0 0.0
        %v1271 = vand.u32 %v473, 4294901760
        %v1272 = vsub.f32 %v473, %v1271
        %v1273 = vand.u32 %v1272, 4294901760
        %1274 = vmatpush1.msra.mxu0 %v1273
        %1275 = vmatprep.subr.mxu0 0.0
        %1276 = vmatpush2.msra.mxu0 0.0
        %1277 = vmatprep.subr.mxu0 0.0
        %1278 = vmatpush2.msra.mxu0 0.0
        %1279 = vmatprep.subr.mxu0 0.0
        %1280 = vmatpush2.msra.mxu0 0.0
        %1281 = vmatprep.subr.mxu0 0.0
        %1282 = vmatpush2.msra.mxu0 0.0
        %1283 = vmatprep.subr.mxu0 0.0
        %1284 = vmatpush2.msra.mxu0 0.0
        %1285 = vmatprep.subr.mxu0 0.0
        %1286 = vmatpush2.msra.mxu0 0.0
        %1287 = vmatprep.subr.mxu0 0.0
        %1288 = vmatpush2.msra.mxu0 0.0
        %1289 = vmatprep.subr.mxu0 0.0
        %1290 = vmatpush2.msra.mxu0 0.0
        %1291 = vmatprep.subr.mxu0 0.0
        %1292 = vmatpush2.msra.mxu0 0.0
        %1293 = vmatprep.subr.mxu0 0.0
        %1294 = vmatpush2.msra.mxu0 0.0
        %1295 = vmatprep.subr.mxu0 0.0
        %1296 = vmatpush2.msra.mxu0 0.0
        %1297 = vmatprep.subr.mxu0 0.0
        %1298 = vmatpush2.msra.mxu0 0.0
        %1299 = vmatprep.subr.mxu0 0.0
        %1300 = vmatpush2.msra.mxu0 0.0
        %1301 = vmatprep.subr.mxu0 0.0
        %1302 = vmatpush2.msra.mxu0 0.0
        %1303 = vmatprep.subr.mxu0 0.0
        %1304 = vmatpush2.msra.mxu0 0.0
        %1305 = vmatprep.subr.mxu0 0.0
        %1306 = vmatpush2.msra.mxu0 0.0
        %1307 = vmatprep.mubr.f32.mxu0 0.0
        %v1308 = vand.u32 %v466, 4294901760
        %1309 = vmatmul.mubr.f32.gmra.mxu0 %v1308
        %v1310 = vpop.f32.mrf.mxu0
        %v1311 = vadd.f32 %v1237, %v1310
        %v1312 = vpop.f32.mrf.mxu0
        %1313 = vdwg.mxu0
        %1314 = vmatprep.subr.mxu0 0.0
        %1315 = vmatpush1.msra.mxu0 0.0
        %1316 = vmatprep.subr.mxu0 0.0
        %1317 = vmatpush1.msra.mxu0 0.0
        %1318 = vmatprep.subr.mxu0 0.0
        %1319 = vmatpush1.msra.mxu0 0.0
        %1320 = vmatprep.subr.mxu0 0.0
        %1321 = vmatpush1.msra.mxu0 0.0
        %1322 = vmatprep.subr.mxu0 0.0
        %1323 = vmatpush1.msra.mxu0 0.0
        %1324 = vmatprep.subr.mxu0 0.0
        %1325 = vmatpush1.msra.mxu0 0.0
        %1326 = vmatprep.subr.mxu0 0.0
        %1327 = vmatpush1.msra.mxu0 0.0
        %1328 = vmatprep.subr.mxu0 0.0
        %1329 = vmatpush1.msra.mxu0 0.0
        %1330 = vmatprep.subr.mxu0 0.0
        %1331 = vmatpush1.msra.mxu0 0.0
        %1332 = vmatprep.subr.mxu0 0.0
        %1333 = vmatpush1.msra.mxu0 0.0
        %1334 = vmatprep.subr.mxu0 0.0
        %1335 = vmatpush1.msra.mxu0 0.0
        %1336 = vmatprep.subr.mxu0 0.0
        %1337 = vmatpush1.msra.mxu0 0.0
        %1338 = vmatprep.subr.mxu0 0.0
        %1339 = vmatpush1.msra.mxu0 0.0
        %1340 = vmatprep.subr.mxu0 0.0
        %1341 = vmatpush1.msra.mxu0 0.0
        %1342 = vmatprep.subr.mxu0 0.0
        %1343 = vmatpush1.msra.mxu0 0.0
        %1344 = vmatprep.subr.mxu0 0.0
        %v1345 = vand.u32 %v473, 4294901760
        %1346 = vmatpush1.msra.mxu0 %v1345
        %1347 = vmatprep.subr.mxu0 0.0
        %1348 = vmatpush2.msra.mxu0 0.0
        %1349 = vmatprep.subr.mxu0 0.0
        %1350 = vmatpush2.msra.mxu0 0.0
        %1351 = vmatprep.subr.mxu0 0.0
        %1352 = vmatpush2.msra.mxu0 0.0
        %1353 = vmatprep.subr.mxu0 0.0
        %1354 = vmatpush2.msra.mxu0 0.0
        %1355 = vmatprep.subr.mxu0 0.0
        %1356 = vmatpush2.msra.mxu0 0.0
        %1357 = vmatprep.subr.mxu0 0.0
        %1358 = vmatpush2.msra.mxu0 0.0
        %1359 = vmatprep.subr.mxu0 0.0
        %1360 = vmatpush2.msra.mxu0 0.0
        %1361 = vmatprep.subr.mxu0 0.0
        %1362 = vmatpush2.msra.mxu0 0.0
        %1363 = vmatprep.subr.mxu0 0.0
        %1364 = vmatpush2.msra.mxu0 0.0
        %1365 = vmatprep.subr.mxu0 0.0
        %1366 = vmatpush2.msra.mxu0 0.0
        %1367 = vmatprep.subr.mxu0 0.0
        %1368 = vmatpush2.msra.mxu0 0.0
        %1369 = vmatprep.subr.mxu0 0.0
        %1370 = vmatpush2.msra.mxu0 0.0
        %1371 = vmatprep.subr.mxu0 0.0
        %1372 = vmatpush2.msra.mxu0 0.0
        %1373 = vmatprep.subr.mxu0 0.0
        %1374 = vmatpush2.msra.mxu0 0.0
        %1375 = vmatprep.subr.mxu0 0.0
        %1376 = vmatpush2.msra.mxu0 0.0
        %1377 = vmatprep.subr.mxu0 0.0
        %1378 = vmatpush2.msra.mxu0 0.0
        %1379 = vmatprep.mubr.f32.mxu0 0.0
        %v1380 = vand.u32 %v466, 4294901760
        %1381 = vmatmul.mubr.f32.gmra.mxu0 %v1380
        %v1382 = vpop.f32.mrf.mxu0
        %v1383 = vadd.f32 %v1311, %v1382
        %v1384 = vpop.f32.mrf.mxu0
        %1385 = vdwg.mxu0
        %v1386 = vmin.f32 %v936, 20.0
        %v1387 = vmin.f32 %v938, 20.0
        %v1388 = vmin.f32 %v1383, 20.0
        %v1389 = vmul.f32 %v1386, 1.442695
        %v1390 = vpow.pop %v1389
        %v1391 = vmul.f32 %v1387, 1.442695
        %v1392 = vpow.pop %v1391
        %v1393 = vmul.f32 %v1388, 1.442695
        %v1394 = vpow.pop %v1393
        %v1395 = vadd.f32 %v1390, 2.0
        %v1396 = vadd.f32 %v1392, 2.0
        %v1397 = vadd.f32 %v1394, 2.0
        %v1398 = vmul.f32 %v1390, %v1395
        %v1399 = vmul.f32 %v1392, %v1396
        %v1400 = vmul.f32 %v1394, %v1397
        %v1401 = vadd.f32 %v1398, 2.0
        %v1402 = vadd.f32 %v1399, 2.0
        %v1403 = vadd.f32 %v1400, 2.0
        %v1404 = vrcp.pop %v1401
        %v1405 = vmul.f32 %v1398, %v1404
        %v1406 = vrcp.pop %v1402
        %v1407 = vmul.f32 %v1399, %v1406
        %v1408 = vrcp.pop %v1403
        %v1409 = vmul.f32 %v1400, %v1408
        %v1410 = vmul.f32 %v936, %v1405
        %v1411 = vmul.f32 %v938, %v1407
        %v1412 = vmul.f32 %v1383, %v1409
        %v1413 = vld [vmem:[%s1] sm:$0x7]
        %v1415 = vlaneseq
        %v1416 = vshrl.u32 %v1415, 7
        %v1417 = vsub.s32 0, %v1416
        %v1418 = vrot.slane %v1413, %v1417
        %v1419 = vlaneseq
        %v1420 = vshrl.u32 %v1419, 7
        %v1421 = vsub.s32 1, %v1420
        %v1422 = vrot.slane %v1413, %v1421
        %v1423 = vlaneseq
        %v1424 = vshrl.u32 %v1423, 7
        %v1425 = vsub.s32 2, %v1424
        %v1426 = vrot.slane %v1413, %v1425
        %v1430 = vmul.f32 %v1410, %v1418
        %v1431 = vmul.f32 %v1411, %v1422
        %v1432 = vmul.f32 %v1412, %v1426
        %1433 = vst [vmem:[#allocation2] sm:$0xff] %v1430
        %1434 = vst [vmem:[#allocation2 + $0x8] sm:$0xff] %v1431
        %vm1435 = vcmask 703488
        %1436 = vst.msk [vmem:[#allocation2 + $0x10] sm:$0xff] %vm1435, %v1432
        %v1437 = vld [vmem:[%s5] sm:$0xff]
        %v1438 = vld [vmem:[#allocation2] sm:$0xff]
        %v1439 = vld [vmem:[#allocation2 + $0x8] sm:$0xff]
        %v1440 = vld [vmem:[#allocation2 + $0x10] sm:$0xff]
        %1442 = vset.pattern.permute.xlu0 0
        %1443 = vperm.xlu0 %1442, %v1437
        %v1444 = vpop.permute.xlu0 %1443
        %v1446 = vmul.f32 %v1444, %v1438
        %v1447 = vmul.f32 %v1444, %v1439
        %v1448 = vmul.f32 %v1444, %v1440
        %v1449 = vadd.f32 %v1446, 0.0
        %v1450 = vadd.f32 %v1447, 0.0
        %v1451 = vadd.f32 %v1448, 0.0
        %1452 = vset.pattern.permute.xlu0 1
        %1453 = vperm.xlu0 %1452, %v1437
        %v1454 = vpop.permute.xlu0 %1453
        %v1456 = vmul.f32 %v1454, %v1438
        %v1457 = vmul.f32 %v1454, %v1439
        %v1458 = vmul.f32 %v1454, %v1440
        %1462 = vrot.lane.b32.xlu0 %v1456, 127
        %v1463 = vpop.permute.xlu0 %1462
        %1464 = vrot.lane.b32.xlu0 %v1457, 127
        %v1465 = vpop.permute.xlu0 %1464
        %1466 = vrot.lane.b32.xlu0 %v1458, 127
        %v1467 = vpop.permute.xlu0 %1466
        %vm1468 = vcmask 1039360
        %v1469 = vsel %vm1468, %v1463, %v1465
        %v1470 = vsel %vm1468, %v1465, %v1467
        %v1474 = vadd.f32 %v1449, %v1469
        %v1475 = vadd.f32 %v1450, %v1470
        %v1476 = vadd.f32 %v1451, %v1467
        %1477 = vset.pattern.permute.xlu0 2
        %1478 = vperm.xlu0 %1477, %v1437
        %v1479 = vpop.permute.xlu0 %1478
        %v1481 = vmul.f32 %v1479, %v1438
        %v1482 = vmul.f32 %v1479, %v1439
        %v1483 = vmul.f32 %v1479, %v1440
        %1487 = vrot.lane.b32.xlu0 %v1481, 126
        %v1488 = vpop.permute.xlu0 %1487
        %1489 = vrot.lane.b32.xlu0 %v1482, 126
        %v1490 = vpop.permute.xlu0 %1489
        %1491 = vrot.lane.b32.xlu0 %v1483, 126
        %v1492 = vpop.permute.xlu0 %1491
        %vm1493 = vcmask 1031168
        %v1494 = vsel %vm1493, %v1488, %v1490
        %v1495 = vsel %vm1493, %v1490, %v1492
        %v1499 = vadd.f32 %v1474, %v1494
        %v1500 = vadd.f32 %v1475, %v1495
        %v1501 = vadd.f32 %v1476, %v1492
        %1502 = vset.pattern.permute.xlu0 3
        %1503 = vperm.xlu0 %1502, %v1437
        %v1504 = vpop.permute.xlu0 %1503
        %v1506 = vmul.f32 %v1504, %v1438
        %v1507 = vmul.f32 %v1504, %v1439
        %v1508 = vmul.f32 %v1504, %v1440
        %1512 = vrot.lane.b32.xlu0 %v1506, 110
        %v1513 = vpop.permute.xlu0 %1512
        %1514 = vrot.lane.b32.xlu0 %v1507, 110
        %v1515 = vpop.permute.xlu0 %1514
        %1516 = vrot.lane.b32.xlu0 %v1508, 110
        %v1517 = vpop.permute.xlu0 %1516
        %vm1518 = vcmask 900096
        %v1519 = vsel %vm1518, %v1513, %v1515
        %v1520 = vsel %vm1518, %v1515, %v1517
        %v1524 = vadd.f32 %v1499, %v1519
        %v1525 = vadd.f32 %v1500, %v1520
        %v1526 = vadd.f32 %v1501, %v1517
        %1527 = vset.pattern.permute.xlu0 4
        %1528 = vperm.xlu0 %1527, %v1437
        %v1529 = vpop.permute.xlu0 %1528
        %v1531 = vmul.f32 %v1529, %v1438
        %v1532 = vmul.f32 %v1529, %v1439
        %v1533 = vmul.f32 %v1529, %v1440
        %1537 = vrot.lane.b32.xlu0 %v1531, 109
        %v1538 = vpop.permute.xlu0 %1537
        %1539 = vrot.lane.b32.xlu0 %v1532, 109
        %v1540 = vpop.permute.xlu0 %1539
        %1541 = vrot.lane.b32.xlu0 %v1533, 109
        %v1542 = vpop.permute.xlu0 %1541
        %vm1543 = vcmask 891904
        %v1544 = vsel %vm1543, %v1538, %v1540
        %v1545 = vsel %vm1543, %v1540, %v1542
        %v1549 = vadd.f32 %v1524, %v1544
        %v1550 = vadd.f32 %v1525, %v1545
        %v1551 = vadd.f32 %v1526, %v1542
        %1552 = vset.pattern.permute.xlu0 5
        %1553 = vperm.xlu0 %1552, %v1437
        %v1554 = vpop.permute.xlu0 %1553
        %v1556 = vmul.f32 %v1554, %v1438
        %v1557 = vmul.f32 %v1554, %v1439
        %v1558 = vmul.f32 %v1554, %v1440
        %1562 = vrot.lane.b32.xlu0 %v1556, 108
        %v1563 = vpop.permute.xlu0 %1562
        %1564 = vrot.lane.b32.xlu0 %v1557, 108
        %v1565 = vpop.permute.xlu0 %1564
        %1566 = vrot.lane.b32.xlu0 %v1558, 108
        %v1567 = vpop.permute.xlu0 %1566
        %vm1568 = vcmask 883712
        %v1569 = vsel %vm1568, %v1563, %v1565
        %v1570 = vsel %vm1568, %v1565, %v1567
        %v1574 = vadd.f32 %v1549, %v1569
        %v1575 = vadd.f32 %v1550, %v1570
        %v1576 = vadd.f32 %v1551, %v1567
        %1577 = vset.pattern.permute.xlu0 6
        %1578 = vperm.xlu0 %1577, %v1437
        %v1579 = vpop.permute.xlu0 %1578
        %v1581 = vmul.f32 %v1579, %v1438
        %v1582 = vmul.f32 %v1579, %v1439
        %v1583 = vmul.f32 %v1579, %v1440
        %1587 = vrot.lane.b32.xlu0 %v1581, 92
        %v1588 = vpop.permute.xlu0 %1587
        %1589 = vrot.lane.b32.xlu0 %v1582, 92
        %v1590 = vpop.permute.xlu0 %1589
        %1591 = vrot.lane.b32.xlu0 %v1583, 92
        %v1592 = vpop.permute.xlu0 %1591
        %vm1593 = vcmask 752640
        %v1594 = vsel %vm1593, %v1588, %v1590
        %v1595 = vsel %vm1593, %v1590, %v1592
        %v1599 = vadd.f32 %v1574, %v1594
        %v1600 = vadd.f32 %v1575, %v1595
        %v1601 = vadd.f32 %v1576, %v1592
        %1602 = vset.pattern.permute.xlu0 7
        %1603 = vperm.xlu0 %1602, %v1437
        %v1604 = vpop.permute.xlu0 %1603
        %v1606 = vmul.f32 %v1604, %v1438
        %v1607 = vmul.f32 %v1604, %v1439
        %v1608 = vmul.f32 %v1604, %v1440
        %1612 = vrot.lane.b32.xlu0 %v1606, 91
        %v1613 = vpop.permute.xlu0 %1612
        %1614 = vrot.lane.b32.xlu0 %v1607, 91
        %v1615 = vpop.permute.xlu0 %1614
        %1616 = vrot.lane.b32.xlu0 %v1608, 91
        %v1617 = vpop.permute.xlu0 %1616
        %vm1618 = vcmask 744448
        %v1619 = vsel %vm1618, %v1613, %v1615
        %v1620 = vsel %vm1618, %v1615, %v1617
        %v1624 = vadd.f32 %v1599, %v1619
        %v1625 = vadd.f32 %v1600, %v1620
        %v1626 = vadd.f32 %v1601, %v1617
        %1627 = vset.pattern.permute.xlu0 8
        %1628 = vperm.xlu0 %1627, %v1437
        %v1629 = vpop.permute.xlu0 %1628
        %v1631 = vmul.f32 %v1629, %v1438
        %v1632 = vmul.f32 %v1629, %v1439
        %v1633 = vmul.f32 %v1629, %v1440
        %1637 = vrot.lane.b32.xlu0 %v1631, 90
        %v1638 = vpop.permute.xlu0 %1637
        %1639 = vrot.lane.b32.xlu0 %v1632, 90
        %v1640 = vpop.permute.xlu0 %1639
        %1641 = vrot.lane.b32.xlu0 %v1633, 90
        %v1642 = vpop.permute.xlu0 %1641
        %vm1643 = vcmask 736256
        %v1644 = vsel %vm1643, %v1638, %v1640
        %v1645 = vsel %vm1643, %v1640, %v1642
        %v1649 = vadd.f32 %v1624, %v1644
        %v1650 = vadd.f32 %v1625, %v1645
        %v1651 = vadd.f32 %v1626, %v1642
        %v1652 = vld [vmem:[%s6] sm:$0xff]
        %1654 = vset.pattern.permute.xlu0 0
        %1655 = vperm.xlu0 %1654, %v1652
        %v1656 = vpop.permute.xlu0 %1655
        %v1658 = vadd.f32 %v1649, %v1656
        %v1659 = vadd.f32 %v1650, %v1656
        %v1660 = vadd.f32 %v1651, %v1656
        %v1661 = vmin.f32 %v1658, 20.0
        %v1662 = vmin.f32 %v1659, 20.0
        %v1663 = vmin.f32 %v1660, 20.0
        %v1664 = vmul.f32 %v1661, 1.442695
        %v1665 = vpow.pop %v1664
        %v1666 = vmul.f32 %v1662, 1.442695
        %v1667 = vpow.pop %v1666
        %v1668 = vmul.f32 %v1663, 1.442695
        %v1669 = vpow.pop %v1668
        %v1670 = vadd.f32 %v1665, 2.0
        %v1671 = vadd.f32 %v1667, 2.0
        %v1672 = vadd.f32 %v1669, 2.0
        %v1673 = vmul.f32 %v1665, %v1670
        %v1674 = vmul.f32 %v1667, %v1671
        %v1675 = vmul.f32 %v1669, %v1672
        %v1676 = vadd.f32 %v1673, 2.0
        %v1677 = vadd.f32 %v1674, 2.0
        %v1678 = vadd.f32 %v1675, 2.0
        %v1679 = vrcp.pop %v1676
        %v1680 = vmul.f32 %v1673, %v1679
        %v1681 = vrcp.pop %v1677
        %v1682 = vmul.f32 %v1674, %v1681
        %v1683 = vrcp.pop %v1678
        %v1684 = vmul.f32 %v1675, %v1683
        %v1685 = vmul.f32 %v1658, %v1680
        %v1686 = vmul.f32 %v1659, %v1682
        %v1687 = vmul.f32 %v1660, %v1684
        %v1688 = vld [vmem:[#allocation3] sm:$0x7]
        %v1690 = vlaneseq
        %v1691 = vshrl.u32 %v1690, 7
        %v1692 = vsub.s32 0, %v1691
        %v1693 = vrot.slane %v1688, %v1692
        %v1694 = vlaneseq
        %v1695 = vshrl.u32 %v1694, 7
        %v1696 = vsub.s32 1, %v1695
        %v1697 = vrot.slane %v1688, %v1696
        %v1698 = vlaneseq
        %v1699 = vshrl.u32 %v1698, 7
        %v1700 = vsub.s32 2, %v1699
        %v1701 = vrot.slane %v1688, %v1700
        %v1705 = vmul.f32 %v1685, %v1693
        %v1706 = vmul.f32 %v1686, %v1697
        %v1707 = vmul.f32 %v1687, %v1701
        %v1708 = vadd.f32 %v1705, %v1706
        %vm1709 = vcmask 261120
        %v1710 = vsel %vm1709, %v1707, 0.0
        %v1711 = vadd.f32 %v1708, %v1710
        %1712 = vadd.xlane.f32.xlu0 %v1711
        %v1713 = vpop.xlane.xlu0 %1712
        %v1714 = vmul.f32 %v1713, 0.00390625
        %v1715 = vld [vmem:[%s7] sm:$0xff]
        %v1716 = vmul.f32 %v1715, %v1714
        %vm1717 = vcmask 15360
        %v1718 = vsel %vm1717, %v1716, 0.0
        %v1719 = vrot.slane %v1718, 4
        %v1720 = vadd.f32 %v1718, %v1719
        %v1721 = vrot.slane %v1720, 2
        %v1722 = vadd.f32 %v1720, %v1721
        %v1723 = vrot.slane %v1722, 1
        %v1724 = vadd.f32 %v1722, %v1723
        %v1725 = vld [vmem:[%s8] sm:$0x1]
        %v1726 = vadd.f32 %v1724, %v1725
        %v1727 = vmax.f32 %v1726, 0.0
        %v1728 = vld [vmem:[%s9] sm:$0xff]
        %v1729 = vlaneseq
        %v1730 = vshrl.u32 %v1729, 7
        %v1731 = vsub.s32 0, %v1730
        %v1732 = vrot.slane %v1727, %v1731
        %v1733 = vmul.f32 %v1728, %v1732
        %v1734 = vsel %vm1717, %v1733, 0.0
        %1735 = vadd.xlane.f32.xlu0 %v1734
        %v1736 = vpop.xlane.xlu0 %1735
        %v1737 = vld [vmem:[%s10] sm:$0xff]
        %v1738 = vadd.f32 %v1736, %v1737
        %v1739 = vadd.f32 %v1738, 3.0
        %v1740 = vmax.f32 %v1739, 0.0
        %v1741 = vmin.f32 %v1740, 6.0
        %v1742 = vmul.f32 %v1741, 0.16666667
        %1744 = vset.pattern.permute.xlu0 0
        %1745 = vperm.xlu0 %1744, %v1742
        %v1746 = vpop.permute.xlu0 %1745
        %v1748 = vmul.f32 %v1705, %v1746
        %v1749 = vmul.f32 %v1706, %v1746
        %v1750 = vmul.f32 %v1707, %v1746
        %v1751 = vld [vmem:[%s11] sm:$0xf]
        %v1752 = vld [vmem:[%s12] sm:$0xf]
        %1754 = vset.pattern.permute.xlu0 0
        %1755 = vperm.xlu0 %1754, %v1752
        %v1756 = vpop.permute.xlu0 %1755
        %vm1758 = vcmask 64512
        %v1760 = vsel %vm1758, %v1751, 0
        %1762 = vmatprep.subr.mxu0 0.0
        %1763 = vmatpush1.msra.mxu0 0.0
        %1764 = vmatprep.subr.mxu0 0.0
        %1765 = vmatpush1.msra.mxu0 0.0
        %1766 = vmatprep.subr.mxu0 0.0
        %1767 = vmatpush1.msra.mxu0 0.0
        %1768 = vmatprep.subr.mxu0 0.0
        %1769 = vmatpush1.msra.mxu0 0.0
        %1770 = vmatprep.subr.mxu0 0.0
        %1771 = vmatpush1.msra.mxu0 0.0
        %1772 = vmatprep.subr.mxu0 0.0
        %1773 = vmatpush1.msra.mxu0 0.0
        %1774 = vmatprep.subr.mxu0 0.0
        %1775 = vmatpush1.msra.mxu0 0.0
        %1776 = vmatprep.subr.mxu0 0.0
        %1777 = vmatpush1.msra.mxu0 0.0
        %1778 = vmatprep.subr.mxu0 0.0
        %1779 = vmatpush1.msra.mxu0 0.0
        %1780 = vmatprep.subr.mxu0 0.0
        %1781 = vmatpush1.msra.mxu0 0.0
        %1782 = vmatprep.subr.mxu0 0.0
        %1783 = vmatpush1.msra.mxu0 0.0
        %1784 = vmatprep.subr.mxu0 0.0
        %1785 = vmatpush1.msra.mxu0 0.0
        %1786 = vmatprep.subr.mxu0 0.0
        %1787 = vmatpush1.msra.mxu0 0.0
        %1788 = vmatprep.subr.mxu0 0.0
        %1789 = vmatpush1.msra.mxu0 0.0
        %1790 = vmatprep.subr.mxu0 0.0
        %1791 = vmatpush1.msra.mxu0 0.0
        %v1792 = vand.u32 %v1749, 4294901760
        %1793 = vmatprep.subr.mxu0 %v1792
        %v1794 = vand.u32 %v1748, 4294901760
        %1795 = vmatpush1.msra.mxu0 %v1794
        %1796 = vmatprep.subr.mxu0 0.0
        %1797 = vmatpush2.msra.mxu0 0.0
        %1798 = vmatprep.subr.mxu0 0.0
        %1799 = vmatpush2.msra.mxu0 0.0
        %1800 = vmatprep.subr.mxu0 0.0
        %1801 = vmatpush2.msra.mxu0 0.0
        %1802 = vmatprep.subr.mxu0 0.0
        %1803 = vmatpush2.msra.mxu0 0.0
        %1804 = vmatprep.subr.mxu0 0.0
        %1805 = vmatpush2.msra.mxu0 0.0
        %1806 = vmatprep.subr.mxu0 0.0
        %1807 = vmatpush2.msra.mxu0 0.0
        %1808 = vmatprep.subr.mxu0 0.0
        %1809 = vmatpush2.msra.mxu0 0.0
        %1810 = vmatprep.subr.mxu0 0.0
        %1811 = vmatpush2.msra.mxu0 0.0
        %1812 = vmatprep.subr.mxu0 0.0
        %1813 = vmatpush2.msra.mxu0 0.0
        %1814 = vmatprep.subr.mxu0 0.0
        %1815 = vmatpush2.msra.mxu0 0.0
        %1816 = vmatprep.subr.mxu0 0.0
        %1817 = vmatpush2.msra.mxu0 0.0
        %1818 = vmatprep.subr.mxu0 0.0
        %1819 = vmatpush2.msra.mxu0 0.0
        %1820 = vmatprep.subr.mxu0 0.0
        %1821 = vmatpush2.msra.mxu0 0.0
        %1822 = vmatprep.subr.mxu0 0.0
        %1823 = vmatpush2.msra.mxu0 0.0
        %1824 = vmatprep.subr.mxu0 0.0
        %1825 = vmatpush2.msra.mxu0 0.0
        %1826 = vmatprep.subr.mxu0 0.0
        %1827 = vmatpush2.msra.mxu0 0.0
        %1828 = vmatprep.mubr.f32.mxu0 0.0
        %v1829 = vand.u32 %v1760, 4294901760
        %v1830 = vsub.f32 %v1760, %v1829
        %v1831 = vand.u32 %v1830, 4294901760
        %v1832 = vsub.f32 %v1830, %v1831
        %v1833 = vand.u32 %v1832, 4294901760
        %1834 = vmatmul.mubr.f32.gmra.mxu0 %v1833
        %v1835 = vpop.f32.mrf.mxu0
        %v1836 = vadd.f32 %v1756, %v1835
        %v1837 = vpop.f32.mrf.mxu0
        %v1838 = vadd.f32 %v1756, %v1837
        %1839 = vdwg.mxu0
        %1840 = vmatprep.subr.mxu0 0.0
        %1841 = vmatpush1.msra.mxu0 0.0
        %1842 = vmatprep.subr.mxu0 0.0
        %1843 = vmatpush1.msra.mxu0 0.0
        %1844 = vmatprep.subr.mxu0 0.0
        %1845 = vmatpush1.msra.mxu0 0.0
        %1846 = vmatprep.subr.mxu0 0.0
        %1847 = vmatpush1.msra.mxu0 0.0
        %1848 = vmatprep.subr.mxu0 0.0
        %1849 = vmatpush1.msra.mxu0 0.0
        %1850 = vmatprep.subr.mxu0 0.0
        %1851 = vmatpush1.msra.mxu0 0.0
        %1852 = vmatprep.subr.mxu0 0.0
        %1853 = vmatpush1.msra.mxu0 0.0
        %1854 = vmatprep.subr.mxu0 0.0
        %1855 = vmatpush1.msra.mxu0 0.0
        %1856 = vmatprep.subr.mxu0 0.0
        %1857 = vmatpush1.msra.mxu0 0.0
        %1858 = vmatprep.subr.mxu0 0.0
        %1859 = vmatpush1.msra.mxu0 0.0
        %1860 = vmatprep.subr.mxu0 0.0
        %1861 = vmatpush1.msra.mxu0 0.0
        %1862 = vmatprep.subr.mxu0 0.0
        %1863 = vmatpush1.msra.mxu0 0.0
        %1864 = vmatprep.subr.mxu0 0.0
        %1865 = vmatpush1.msra.mxu0 0.0
        %1866 = vmatprep.subr.mxu0 0.0
        %1867 = vmatpush1.msra.mxu0 0.0
        %1868 = vmatprep.subr.mxu0 0.0
        %1869 = vmatpush1.msra.mxu0 0.0
        %v1870 = vand.u32 %v1749, 4294901760
        %v1871 = vsub.f32 %v1749, %v1870
        %v1872 = vand.u32 %v1871, 4294901760
        %v1873 = vsub.f32 %v1871, %v1872
        %v1874 = vand.u32 %v1873, 4294901760
        %1875 = vmatprep.subr.mxu0 %v1874
        %v1876 = vand.u32 %v1748, 4294901760
        %v1877 = vsub.f32 %v1748, %v1876
        %v1878 = vand.u32 %v1877, 4294901760
        %v1879 = vsub.f32 %v1877, %v1878
        %v1880 = vand.u32 %v1879, 4294901760
        %1881 = vmatpush1.msra.mxu0 %v1880
        %1882 = vmatprep.subr.mxu0 0.0
        %1883 = vmatpush2.msra.mxu0 0.0
        %1884 = vmatprep.subr.mxu0 0.0
        %1885 = vmatpush2.msra.mxu0 0.0
        %1886 = vmatprep.subr.mxu0 0.0
        %1887 = vmatpush2.msra.mxu0 0.0
        %1888 = vmatprep.subr.mxu0 0.0
        %1889 = vmatpush2.msra.mxu0 0.0
        %1890 = vmatprep.subr.mxu0 0.0
        %1891 = vmatpush2.msra.mxu0 0.0
        %1892 = vmatprep.subr.mxu0 0.0
        %1893 = vmatpush2.msra.mxu0 0.0
        %1894 = vmatprep.subr.mxu0 0.0
        %1895 = vmatpush2.msra.mxu0 0.0
        %1896 = vmatprep.subr.mxu0 0.0
        %1897 = vmatpush2.msra.mxu0 0.0
        %1898 = vmatprep.subr.mxu0 0.0
        %1899 = vmatpush2.msra.mxu0 0.0
        %1900 = vmatprep.subr.mxu0 0.0
        %1901 = vmatpush2.msra.mxu0 0.0
        %1902 = vmatprep.subr.mxu0 0.0
        %1903 = vmatpush2.msra.mxu0 0.0
        %1904 = vmatprep.subr.mxu0 0.0
        %1905 = vmatpush2.msra.mxu0 0.0
        %1906 = vmatprep.subr.mxu0 0.0
        %1907 = vmatpush2.msra.mxu0 0.0
        %1908 = vmatprep.subr.mxu0 0.0
        %1909 = vmatpush2.msra.mxu0 0.0
        %1910 = vmatprep.subr.mxu0 0.0
        %1911 = vmatpush2.msra.mxu0 0.0
        %1912 = vmatprep.subr.mxu0 0.0
        %1913 = vmatpush2.msra.mxu0 0.0
        %1914 = vmatprep.mubr.f32.mxu0 0.0
        %v1915 = vand.u32 %v1760, 4294901760
        %1916 = vmatmul.mubr.f32.gmra.mxu0 %v1915
        %v1917 = vpop.f32.mrf.mxu0
        %v1918 = vadd.f32 %v1836, %v1917
        %v1919 = vpop.f32.mrf.mxu0
        %v1920 = vadd.f32 %v1838, %v1919
        %1921 = vdwg.mxu0
        %1922 = vmatprep.subr.mxu0 0.0
        %1923 = vmatpush1.msra.mxu0 0.0
        %1924 = vmatprep.subr.mxu0 0.0
        %1925 = vmatpush1.msra.mxu0 0.0
        %1926 = vmatprep.subr.mxu0 0.0
        %1927 = vmatpush1.msra.mxu0 0.0
        %1928 = vmatprep.subr.mxu0 0.0
        %1929 = vmatpush1.msra.mxu0 0.0
        %1930 = vmatprep.subr.mxu0 0.0
        %1931 = vmatpush1.msra.mxu0 0.0
        %1932 = vmatprep.subr.mxu0 0.0
        %1933 = vmatpush1.msra.mxu0 0.0
        %1934 = vmatprep.subr.mxu0 0.0
        %1935 = vmatpush1.msra.mxu0 0.0
        %1936 = vmatprep.subr.mxu0 0.0
        %1937 = vmatpush1.msra.mxu0 0.0
        %1938 = vmatprep.subr.mxu0 0.0
        %1939 = vmatpush1.msra.mxu0 0.0
        %1940 = vmatprep.subr.mxu0 0.0
        %1941 = vmatpush1.msra.mxu0 0.0
        %1942 = vmatprep.subr.mxu0 0.0
        %1943 = vmatpush1.msra.mxu0 0.0
        %1944 = vmatprep.subr.mxu0 0.0
        %1945 = vmatpush1.msra.mxu0 0.0
        %1946 = vmatprep.subr.mxu0 0.0
        %1947 = vmatpush1.msra.mxu0 0.0
        %1948 = vmatprep.subr.mxu0 0.0
        %1949 = vmatpush1.msra.mxu0 0.0
        %1950 = vmatprep.subr.mxu0 0.0
        %1951 = vmatpush1.msra.mxu0 0.0
        %v1952 = vand.u32 %v1749, 4294901760
        %v1953 = vsub.f32 %v1749, %v1952
        %1954 = vmatprep.subr.mxu0 %v1953
        %v1955 = vand.u32 %v1748, 4294901760
        %v1956 = vsub.f32 %v1748, %v1955
        %1957 = vmatpush1.msra.mxu0 %v1956
        %1958 = vmatprep.subr.mxu0 0.0
        %1959 = vmatpush2.msra.mxu0 0.0
        %1960 = vmatprep.subr.mxu0 0.0
        %1961 = vmatpush2.msra.mxu0 0.0
        %1962 = vmatprep.subr.mxu0 0.0
        %1963 = vmatpush2.msra.mxu0 0.0
        %1964 = vmatprep.subr.mxu0 0.0
        %1965 = vmatpush2.msra.mxu0 0.0
        %1966 = vmatprep.subr.mxu0 0.0
        %1967 = vmatpush2.msra.mxu0 0.0
        %1968 = vmatprep.subr.mxu0 0.0
        %1969 = vmatpush2.msra.mxu0 0.0
        %1970 = vmatprep.subr.mxu0 0.0
        %1971 = vmatpush2.msra.mxu0 0.0
        %1972 = vmatprep.subr.mxu0 0.0
        %1973 = vmatpush2.msra.mxu0 0.0
        %1974 = vmatprep.subr.mxu0 0.0
        %1975 = vmatpush2.msra.mxu0 0.0
        %1976 = vmatprep.subr.mxu0 0.0
        %1977 = vmatpush2.msra.mxu0 0.0
        %1978 = vmatprep.subr.mxu0 0.0
        %1979 = vmatpush2.msra.mxu0 0.0
        %1980 = vmatprep.subr.mxu0 0.0
        %1981 = vmatpush2.msra.mxu0 0.0
        %1982 = vmatprep.subr.mxu0 0.0
        %1983 = vmatpush2.msra.mxu0 0.0
        %1984 = vmatprep.subr.mxu0 0.0
        %1985 = vmatpush2.msra.mxu0 0.0
        %1986 = vmatprep.subr.mxu0 0.0
        %1987 = vmatpush2.msra.mxu0 0.0
        %1988 = vmatprep.subr.mxu0 0.0
        %1989 = vmatpush2.msra.mxu0 0.0
        %1990 = vmatprep.mubr.f32.mxu0 0.0
        %v1991 = vand.u32 %v1760, 4294901760
        %v1992 = vsub.f32 %v1760, %v1991
        %1993 = vmatmul.mubr.f32.gmra.mxu0 %v1992
        %v1994 = vpop.f32.mrf.mxu0
        %v1995 = vadd.f32 %v1918, %v1994
        %v1996 = vpop.f32.mrf.mxu0
        %v1997 = vadd.f32 %v1920, %v1996
        %1998 = vdwg.mxu0
        %1999 = vmatprep.subr.mxu0 0.0
        %2000 = vmatpush1.msra.mxu0 0.0
        %2001 = vmatprep.subr.mxu0 0.0
        %2002 = vmatpush1.msra.mxu0 0.0
        %2003 = vmatprep.subr.mxu0 0.0
        %2004 = vmatpush1.msra.mxu0 0.0
        %2005 = vmatprep.subr.mxu0 0.0
        %2006 = vmatpush1.msra.mxu0 0.0
        %2007 = vmatprep.subr.mxu0 0.0
        %2008 = vmatpush1.msra.mxu0 0.0
        %2009 = vmatprep.subr.mxu0 0.0
        %2010 = vmatpush1.msra.mxu0 0.0
        %2011 = vmatprep.subr.mxu0 0.0
        %2012 = vmatpush1.msra.mxu0 0.0
        %2013 = vmatprep.subr.mxu0 0.0
        %2014 = vmatpush1.msra.mxu0 0.0
        %2015 = vmatprep.subr.mxu0 0.0
        %2016 = vmatpush1.msra.mxu0 0.0
        %2017 = vmatprep.subr.mxu0 0.0
        %2018 = vmatpush1.msra.mxu0 0.0
        %2019 = vmatprep.subr.mxu0 0.0
        %2020 = vmatpush1.msra.mxu0 0.0
        %2021 = vmatprep.subr.mxu0 0.0
        %2022 = vmatpush1.msra.mxu0 0.0
        %2023 = vmatprep.subr.mxu0 0.0
        %2024 = vmatpush1.msra.mxu0 0.0
        %2025 = vmatprep.subr.mxu0 0.0
        %2026 = vmatpush1.msra.mxu0 0.0
        %2027 = vmatprep.subr.mxu0 0.0
        %2028 = vmatpush1.msra.mxu0 0.0
        %v2029 = vand.u32 %v1749, 4294901760
        %2030 = vmatprep.subr.mxu0 %v2029
        %v2031 = vand.u32 %v1748, 4294901760
        %2032 = vmatpush1.msra.mxu0 %v2031
        %2033 = vmatprep.subr.mxu0 0.0
        %2034 = vmatpush2.msra.mxu0 0.0
        %2035 = vmatprep.subr.mxu0 0.0
        %2036 = vmatpush2.msra.mxu0 0.0
        %2037 = vmatprep.subr.mxu0 0.0
        %2038 = vmatpush2.msra.mxu0 0.0
        %2039 = vmatprep.subr.mxu0 0.0
        %2040 = vmatpush2.msra.mxu0 0.0
        %2041 = vmatprep.subr.mxu0 0.0
        %2042 = vmatpush2.msra.mxu0 0.0
        %2043 = vmatprep.subr.mxu0 0.0
        %2044 = vmatpush2.msra.mxu0 0.0
        %2045 = vmatprep.subr.mxu0 0.0
        %2046 = vmatpush2.msra.mxu0 0.0
        %2047 = vmatprep.subr.mxu0 0.0
        %2048 = vmatpush2.msra.mxu0 0.0
        %2049 = vmatprep.subr.mxu0 0.0
        %2050 = vmatpush2.msra.mxu0 0.0
        %2051 = vmatprep.subr.mxu0 0.0
        %2052 = vmatpush2.msra.mxu0 0.0
        %2053 = vmatprep.subr.mxu0 0.0
        %2054 = vmatpush2.msra.mxu0 0.0
        %2055 = vmatprep.subr.mxu0 0.0
        %2056 = vmatpush2.msra.mxu0 0.0
        %2057 = vmatprep.subr.mxu0 0.0
        %2058 = vmatpush2.msra.mxu0 0.0
        %2059 = vmatprep.subr.mxu0 0.0
        %2060 = vmatpush2.msra.mxu0 0.0
        %2061 = vmatprep.subr.mxu0 0.0
        %2062 = vmatpush2.msra.mxu0 0.0
        %2063 = vmatprep.subr.mxu0 0.0
        %2064 = vmatpush2.msra.mxu0 0.0
        %2065 = vmatprep.mubr.f32.mxu0 0.0
        %v2066 = vand.u32 %v1760, 4294901760
        %v2067 = vsub.f32 %v1760, %v2066
        %v2068 = vand.u32 %v2067, 4294901760
        %2069 = vmatmul.mubr.f32.gmra.mxu0 %v2068
        %v2070 = vpop.f32.mrf.mxu0
        %v2071 = vadd.f32 %v1995, %v2070
        %v2072 = vpop.f32.mrf.mxu0
        %v2073 = vadd.f32 %v1997, %v2072
        %2074 = vdwg.mxu0
        %2075 = vmatprep.subr.mxu0 0.0
        %2076 = vmatpush1.msra.mxu0 0.0
        %2077 = vmatprep.subr.mxu0 0.0
        %2078 = vmatpush1.msra.mxu0 0.0
        %2079 = vmatprep.subr.mxu0 0.0
        %2080 = vmatpush1.msra.mxu0 0.0
        %2081 = vmatprep.subr.mxu0 0.0
        %2082 = vmatpush1.msra.mxu0 0.0
        %2083 = vmatprep.subr.mxu0 0.0
        %2084 = vmatpush1.msra.mxu0 0.0
        %2085 = vmatprep.subr.mxu0 0.0
        %2086 = vmatpush1.msra.mxu0 0.0
        %2087 = vmatprep.subr.mxu0 0.0
        %2088 = vmatpush1.msra.mxu0 0.0
        %2089 = vmatprep.subr.mxu0 0.0
        %2090 = vmatpush1.msra.mxu0 0.0
        %2091 = vmatprep.subr.mxu0 0.0
        %2092 = vmatpush1.msra.mxu0 0.0
        %2093 = vmatprep.subr.mxu0 0.0
        %2094 = vmatpush1.msra.mxu0 0.0
        %2095 = vmatprep.subr.mxu0 0.0
        %2096 = vmatpush1.msra.mxu0 0.0
        %2097 = vmatprep.subr.mxu0 0.0
        %2098 = vmatpush1.msra.mxu0 0.0
        %2099 = vmatprep.subr.mxu0 0.0
        %2100 = vmatpush1.msra.mxu0 0.0
        %2101 = vmatprep.subr.mxu0 0.0
        %2102 = vmatpush1.msra.mxu0 0.0
        %2103 = vmatprep.subr.mxu0 0.0
        %2104 = vmatpush1.msra.mxu0 0.0
        %v2105 = vand.u32 %v1749, 4294901760
        %v2106 = vsub.f32 %v1749, %v2105
        %v2107 = vand.u32 %v2106, 4294901760
        %2108 = vmatprep.subr.mxu0 %v2107
        %v2109 = vand.u32 %v1748, 4294901760
        %v2110 = vsub.f32 %v1748, %v2109
        %v2111 = vand.u32 %v2110, 4294901760
        %2112 = vmatpush1.msra.mxu0 %v2111
        %2113 = vmatprep.subr.mxu0 0.0
        %2114 = vmatpush2.msra.mxu0 0.0
        %2115 = vmatprep.subr.mxu0 0.0
        %2116 = vmatpush2.msra.mxu0 0.0
        %2117 = vmatprep.subr.mxu0 0.0
        %2118 = vmatpush2.msra.mxu0 0.0
        %2119 = vmatprep.subr.mxu0 0.0
        %2120 = vmatpush2.msra.mxu0 0.0
        %2121 = vmatprep.subr.mxu0 0.0
        %2122 = vmatpush2.msra.mxu0 0.0
        %2123 = vmatprep.subr.mxu0 0.0
        %2124 = vmatpush2.msra.mxu0 0.0
        %2125 = vmatprep.subr.mxu0 0.0
        %2126 = vmatpush2.msra.mxu0 0.0
        %2127 = vmatprep.subr.mxu0 0.0
        %2128 = vmatpush2.msra.mxu0 0.0
        %2129 = vmatprep.subr.mxu0 0.0
        %2130 = vmatpush2.msra.mxu0 0.0
        %2131 = vmatprep.subr.mxu0 0.0
        %2132 = vmatpush2.msra.mxu0 0.0
        %2133 = vmatprep.subr.mxu0 0.0
        %2134 = vmatpush2.msra.mxu0 0.0
        %2135 = vmatprep.subr.mxu0 0.0
        %2136 = vmatpush2.msra.mxu0 0.0
        %2137 = vmatprep.subr.mxu0 0.0
        %2138 = vmatpush2.msra.mxu0 0.0
        %2139 = vmatprep.subr.mxu0 0.0
        %2140 = vmatpush2.msra.mxu0 0.0
        %2141 = vmatprep.subr.mxu0 0.0
        %2142 = vmatpush2.msra.mxu0 0.0
        %2143 = vmatprep.subr.mxu0 0.0
        %2144 = vmatpush2.msra.mxu0 0.0
        %2145 = vmatprep.mubr.f32.mxu0 0.0
        %v2146 = vand.u32 %v1760, 4294901760
        %2147 = vmatmul.mubr.f32.gmra.mxu0 %v2146
        %v2148 = vpop.f32.mrf.mxu0
        %v2149 = vadd.f32 %v2071, %v2148
        %v2150 = vpop.f32.mrf.mxu0
        %v2151 = vadd.f32 %v2073, %v2150
        %2152 = vdwg.mxu0
        %2153 = vmatprep.subr.mxu0 0.0
        %2154 = vmatpush1.msra.mxu0 0.0
        %2155 = vmatprep.subr.mxu0 0.0
        %2156 = vmatpush1.msra.mxu0 0.0
        %2157 = vmatprep.subr.mxu0 0.0
        %2158 = vmatpush1.msra.mxu0 0.0
        %2159 = vmatprep.subr.mxu0 0.0
        %2160 = vmatpush1.msra.mxu0 0.0
        %2161 = vmatprep.subr.mxu0 0.0
        %2162 = vmatpush1.msra.mxu0 0.0
        %2163 = vmatprep.subr.mxu0 0.0
        %2164 = vmatpush1.msra.mxu0 0.0
        %2165 = vmatprep.subr.mxu0 0.0
        %2166 = vmatpush1.msra.mxu0 0.0
        %2167 = vmatprep.subr.mxu0 0.0
        %2168 = vmatpush1.msra.mxu0 0.0
        %2169 = vmatprep.subr.mxu0 0.0
        %2170 = vmatpush1.msra.mxu0 0.0
        %2171 = vmatprep.subr.mxu0 0.0
        %2172 = vmatpush1.msra.mxu0 0.0
        %2173 = vmatprep.subr.mxu0 0.0
        %2174 = vmatpush1.msra.mxu0 0.0
        %2175 = vmatprep.subr.mxu0 0.0
        %2176 = vmatpush1.msra.mxu0 0.0
        %2177 = vmatprep.subr.mxu0 0.0
        %2178 = vmatpush1.msra.mxu0 0.0
        %2179 = vmatprep.subr.mxu0 0.0
        %2180 = vmatpush1.msra.mxu0 0.0
        %2181 = vmatprep.subr.mxu0 0.0
        %2182 = vmatpush1.msra.mxu0 0.0
        %v2183 = vand.u32 %v1749, 4294901760
        %2184 = vmatprep.subr.mxu0 %v2183
        %v2185 = vand.u32 %v1748, 4294901760
        %2186 = vmatpush1.msra.mxu0 %v2185
        %2187 = vmatprep.subr.mxu0 0.0
        %2188 = vmatpush2.msra.mxu0 0.0
        %2189 = vmatprep.subr.mxu0 0.0
        %2190 = vmatpush2.msra.mxu0 0.0
        %2191 = vmatprep.subr.mxu0 0.0
        %2192 = vmatpush2.msra.mxu0 0.0
        %2193 = vmatprep.subr.mxu0 0.0
        %2194 = vmatpush2.msra.mxu0 0.0
        %2195 = vmatprep.subr.mxu0 0.0
        %2196 = vmatpush2.msra.mxu0 0.0
        %2197 = vmatprep.subr.mxu0 0.0
        %2198 = vmatpush2.msra.mxu0 0.0
        %2199 = vmatprep.subr.mxu0 0.0
        %2200 = vmatpush2.msra.mxu0 0.0
        %2201 = vmatprep.subr.mxu0 0.0
        %2202 = vmatpush2.msra.mxu0 0.0
        %2203 = vmatprep.subr.mxu0 0.0
        %2204 = vmatpush2.msra.mxu0 0.0
        %2205 = vmatprep.subr.mxu0 0.0
        %2206 = vmatpush2.msra.mxu0 0.0
        %2207 = vmatprep.subr.mxu0 0.0
        %2208 = vmatpush2.msra.mxu0 0.0
        %2209 = vmatprep.subr.mxu0 0.0
        %2210 = vmatpush2.msra.mxu0 0.0
        %2211 = vmatprep.subr.mxu0 0.0
        %2212 = vmatpush2.msra.mxu0 0.0
        %2213 = vmatprep.subr.mxu0 0.0
        %2214 = vmatpush2.msra.mxu0 0.0
        %2215 = vmatprep.subr.mxu0 0.0
        %2216 = vmatpush2.msra.mxu0 0.0
        %2217 = vmatprep.subr.mxu0 0.0
        %2218 = vmatpush2.msra.mxu0 0.0
        %2219 = vmatprep.mubr.f32.mxu0 0.0
        %v2220 = vand.u32 %v1760, 4294901760
        %2221 = vmatmul.mubr.f32.gmra.mxu0 %v2220
        %v2222 = vpop.f32.mrf.mxu0
        %v2223 = vadd.f32 %v2149, %v2222
        %v2224 = vpop.f32.mrf.mxu0
        %v2225 = vadd.f32 %v2151, %v2224
        %2226 = vdwg.mxu0
        %2227 = vmatprep.subr.mxu0 0.0
        %2228 = vmatpush1.msra.mxu0 0.0
        %2229 = vmatprep.subr.mxu0 0.0
        %2230 = vmatpush1.msra.mxu0 0.0
        %2231 = vmatprep.subr.mxu0 0.0
        %2232 = vmatpush1.msra.mxu0 0.0
        %2233 = vmatprep.subr.mxu0 0.0
        %2234 = vmatpush1.msra.mxu0 0.0
        %2235 = vmatprep.subr.mxu0 0.0
        %2236 = vmatpush1.msra.mxu0 0.0
        %2237 = vmatprep.subr.mxu0 0.0
        %2238 = vmatpush1.msra.mxu0 0.0
        %2239 = vmatprep.subr.mxu0 0.0
        %2240 = vmatpush1.msra.mxu0 0.0
        %2241 = vmatprep.subr.mxu0 0.0
        %2242 = vmatpush1.msra.mxu0 0.0
        %2243 = vmatprep.subr.mxu0 0.0
        %2244 = vmatpush1.msra.mxu0 0.0
        %2245 = vmatprep.subr.mxu0 0.0
        %2246 = vmatpush1.msra.mxu0 0.0
        %2247 = vmatprep.subr.mxu0 0.0
        %2248 = vmatpush1.msra.mxu0 0.0
        %2249 = vmatprep.subr.mxu0 0.0
        %2250 = vmatpush1.msra.mxu0 0.0
        %2251 = vmatprep.subr.mxu0 0.0
        %2252 = vmatpush1.msra.mxu0 0.0
        %2253 = vmatprep.subr.mxu0 0.0
        %2254 = vmatpush1.msra.mxu0 0.0
        %2255 = vmatprep.subr.mxu0 0.0
        %2256 = vmatpush1.msra.mxu0 0.0
        %2257 = vmatprep.subr.mxu0 0.0
        %v2258 = vand.u32 %v1750, 4294901760
        %2259 = vmatpush1.msra.mxu0 %v2258
        %2260 = vmatprep.subr.mxu0 0.0
        %2261 = vmatpush2.msra.mxu0 0.0
        %2262 = vmatprep.subr.mxu0 0.0
        %2263 = vmatpush2.msra.mxu0 0.0
        %2264 = vmatprep.subr.mxu0 0.0
        %2265 = vmatpush2.msra.mxu0 0.0
        %2266 = vmatprep.subr.mxu0 0.0
        %2267 = vmatpush2.msra.mxu0 0.0
        %2268 = vmatprep.subr.mxu0 0.0
        %2269 = vmatpush2.msra.mxu0 0.0
        %2270 = vmatprep.subr.mxu0 0.0
        %2271 = vmatpush2.msra.mxu0 0.0
        %2272 = vmatprep.subr.mxu0 0.0
        %2273 = vmatpush2.msra.mxu0 0.0
        %2274 = vmatprep.subr.mxu0 0.0
        %2275 = vmatpush2.msra.mxu0 0.0
        %2276 = vmatprep.subr.mxu0 0.0
        %2277 = vmatpush2.msra.mxu0 0.0
        %2278 = vmatprep.subr.mxu0 0.0
        %2279 = vmatpush2.msra.mxu0 0.0
        %2280 = vmatprep.subr.mxu0 0.0
        %2281 = vmatpush2.msra.mxu0 0.0
        %2282 = vmatprep.subr.mxu0 0.0
        %2283 = vmatpush2.msra.mxu0 0.0
        %2284 = vmatprep.subr.mxu0 0.0
        %2285 = vmatpush2.msra.mxu0 0.0
        %2286 = vmatprep.subr.mxu0 0.0
        %2287 = vmatpush2.msra.mxu0 0.0
        %2288 = vmatprep.subr.mxu0 0.0
        %2289 = vmatpush2.msra.mxu0 0.0
        %2290 = vmatprep.subr.mxu0 0.0
        %2291 = vmatpush2.msra.mxu0 0.0
        %2292 = vmatprep.mubr.f32.mxu0 0.0
        %v2293 = vand.u32 %v1760, 4294901760
        %v2294 = vsub.f32 %v1760, %v2293
        %v2295 = vand.u32 %v2294, 4294901760
        %v2296 = vsub.f32 %v2294, %v2295
        %v2297 = vand.u32 %v2296, 4294901760
        %2298 = vmatmul.mubr.f32.gmra.mxu0 %v2297
        %v2299 = vpop.f32.mrf.mxu0
        %v2300 = vadd.f32 %v1756, %v2299
        %v2301 = vpop.f32.mrf.mxu0
        %2302 = vdwg.mxu0
        %2303 = vmatprep.subr.mxu0 0.0
        %2304 = vmatpush1.msra.mxu0 0.0
        %2305 = vmatprep.subr.mxu0 0.0
        %2306 = vmatpush1.msra.mxu0 0.0
        %2307 = vmatprep.subr.mxu0 0.0
        %2308 = vmatpush1.msra.mxu0 0.0
        %2309 = vmatprep.subr.mxu0 0.0
        %2310 = vmatpush1.msra.mxu0 0.0
        %2311 = vmatprep.subr.mxu0 0.0
        %2312 = vmatpush1.msra.mxu0 0.0
        %2313 = vmatprep.subr.mxu0 0.0
        %2314 = vmatpush1.msra.mxu0 0.0
        %2315 = vmatprep.subr.mxu0 0.0
        %2316 = vmatpush1.msra.mxu0 0.0
        %2317 = vmatprep.subr.mxu0 0.0
        %2318 = vmatpush1.msra.mxu0 0.0
        %2319 = vmatprep.subr.mxu0 0.0
        %2320 = vmatpush1.msra.mxu0 0.0
        %2321 = vmatprep.subr.mxu0 0.0
        %2322 = vmatpush1.msra.mxu0 0.0
        %2323 = vmatprep.subr.mxu0 0.0
        %2324 = vmatpush1.msra.mxu0 0.0
        %2325 = vmatprep.subr.mxu0 0.0
        %2326 = vmatpush1.msra.mxu0 0.0
        %2327 = vmatprep.subr.mxu0 0.0
        %2328 = vmatpush1.msra.mxu0 0.0
        %2329 = vmatprep.subr.mxu0 0.0
        %2330 = vmatpush1.msra.mxu0 0.0
        %2331 = vmatprep.subr.mxu0 0.0
        %2332 = vmatpush1.msra.mxu0 0.0
        %2333 = vmatprep.subr.mxu0 0.0
        %v2334 = vand.u32 %v1750, 4294901760
        %v2335 = vsub.f32 %v1750, %v2334
        %v2336 = vand.u32 %v2335, 4294901760
        %v2337 = vsub.f32 %v2335, %v2336
        %v2338 = vand.u32 %v2337, 4294901760
        %2339 = vmatpush1.msra.mxu0 %v2338
        %2340 = vmatprep.subr.mxu0 0.0
        %2341 = vmatpush2.msra.mxu0 0.0
        %2342 = vmatprep.subr.mxu0 0.0
        %2343 = vmatpush2.msra.mxu0 0.0
        %2344 = vmatprep.subr.mxu0 0.0
        %2345 = vmatpush2.msra.mxu0 0.0
        %2346 = vmatprep.subr.mxu0 0.0
        %2347 = vmatpush2.msra.mxu0 0.0
        %2348 = vmatprep.subr.mxu0 0.0
        %2349 = vmatpush2.msra.mxu0 0.0
        %2350 = vmatprep.subr.mxu0 0.0
        %2351 = vmatpush2.msra.mxu0 0.0
        %2352 = vmatprep.subr.mxu0 0.0
        %2353 = vmatpush2.msra.mxu0 0.0
        %2354 = vmatprep.subr.mxu0 0.0
        %2355 = vmatpush2.msra.mxu0 0.0
        %2356 = vmatprep.subr.mxu0 0.0
        %2357 = vmatpush2.msra.mxu0 0.0
        %2358 = vmatprep.subr.mxu0 0.0
        %2359 = vmatpush2.msra.mxu0 0.0
        %2360 = vmatprep.subr.mxu0 0.0
        %2361 = vmatpush2.msra.mxu0 0.0
        %2362 = vmatprep.subr.mxu0 0.0
        %2363 = vmatpush2.msra.mxu0 0.0
        %2364 = vmatprep.subr.mxu0 0.0
        %2365 = vmatpush2.msra.mxu0 0.0
        %2366 = vmatprep.subr.mxu0 0.0
        %2367 = vmatpush2.msra.mxu0 0.0
        %2368 = vmatprep.subr.mxu0 0.0
        %2369 = vmatpush2.msra.mxu0 0.0
        %2370 = vmatprep.subr.mxu0 0.0
        %2371 = vmatpush2.msra.mxu0 0.0
        %2372 = vmatprep.mubr.f32.mxu0 0.0
        %v2373 = vand.u32 %v1760, 4294901760
        %2374 = vmatmul.mubr.f32.gmra.mxu0 %v2373
        %v2375 = vpop.f32.mrf.mxu0
        %v2376 = vadd.f32 %v2300, %v2375
        %v2377 = vpop.f32.mrf.mxu0
        %2378 = vdwg.mxu0
        %2379 = vmatprep.subr.mxu0 0.0
        %2380 = vmatpush1.msra.mxu0 0.0
        %2381 = vmatprep.subr.mxu0 0.0
        %2382 = vmatpush1.msra.mxu0 0.0
        %2383 = vmatprep.subr.mxu0 0.0
        %2384 = vmatpush1.msra.mxu0 0.0
        %2385 = vmatprep.subr.mxu0 0.0
        %2386 = vmatpush1.msra.mxu0 0.0
        %2387 = vmatprep.subr.mxu0 0.0
        %2388 = vmatpush1.msra.mxu0 0.0
        %2389 = vmatprep.subr.mxu0 0.0
        %2390 = vmatpush1.msra.mxu0 0.0
        %2391 = vmatprep.subr.mxu0 0.0
        %2392 = vmatpush1.msra.mxu0 0.0
        %2393 = vmatprep.subr.mxu0 0.0
        %2394 = vmatpush1.msra.mxu0 0.0
        %2395 = vmatprep.subr.mxu0 0.0
        %2396 = vmatpush1.msra.mxu0 0.0
        %2397 = vmatprep.subr.mxu0 0.0
        %2398 = vmatpush1.msra.mxu0 0.0
        %2399 = vmatprep.subr.mxu0 0.0
        %2400 = vmatpush1.msra.mxu0 0.0
        %2401 = vmatprep.subr.mxu0 0.0
        %2402 = vmatpush1.msra.mxu0 0.0
        %2403 = vmatprep.subr.mxu0 0.0
        %2404 = vmatpush1.msra.mxu0 0.0
        %2405 = vmatprep.subr.mxu0 0.0
        %2406 = vmatpush1.msra.mxu0 0.0
        %2407 = vmatprep.subr.mxu0 0.0
        %2408 = vmatpush1.msra.mxu0 0.0
        %2409 = vmatprep.subr.mxu0 0.0
        %v2410 = vand.u32 %v1750, 4294901760
        %v2411 = vsub.f32 %v1750, %v2410
        %2412 = vmatpush1.msra.mxu0 %v2411
        %2413 = vmatprep.subr.mxu0 0.0
        %2414 = vmatpush2.msra.mxu0 0.0
        %2415 = vmatprep.subr.mxu0 0.0
        %2416 = vmatpush2.msra.mxu0 0.0
        %2417 = vmatprep.subr.mxu0 0.0
        %2418 = vmatpush2.msra.mxu0 0.0
        %2419 = vmatprep.subr.mxu0 0.0
        %2420 = vmatpush2.msra.mxu0 0.0
        %2421 = vmatprep.subr.mxu0 0.0
        %2422 = vmatpush2.msra.mxu0 0.0
        %2423 = vmatprep.subr.mxu0 0.0
        %2424 = vmatpush2.msra.mxu0 0.0
        %2425 = vmatprep.subr.mxu0 0.0
        %2426 = vmatpush2.msra.mxu0 0.0
        %2427 = vmatprep.subr.mxu0 0.0
        %2428 = vmatpush2.msra.mxu0 0.0
        %2429 = vmatprep.subr.mxu0 0.0
        %2430 = vmatpush2.msra.mxu0 0.0
        %2431 = vmatprep.subr.mxu0 0.0
        %2432 = vmatpush2.msra.mxu0 0.0
        %2433 = vmatprep.subr.mxu0 0.0
        %2434 = vmatpush2.msra.mxu0 0.0
        %2435 = vmatprep.subr.mxu0 0.0
        %2436 = vmatpush2.msra.mxu0 0.0
        %2437 = vmatprep.subr.mxu0 0.0
        %2438 = vmatpush2.msra.mxu0 0.0
        %2439 = vmatprep.subr.mxu0 0.0
        %2440 = vmatpush2.msra.mxu0 0.0
        %2441 = vmatprep.subr.mxu0 0.0
        %2442 = vmatpush2.msra.mxu0 0.0
        %2443 = vmatprep.subr.mxu0 0.0
        %2444 = vmatpush2.msra.mxu0 0.0
        %2445 = vmatprep.mubr.f32.mxu0 0.0
        %v2446 = vand.u32 %v1760, 4294901760
        %v2447 = vsub.f32 %v1760, %v2446
        %2448 = vmatmul.mubr.f32.gmra.mxu0 %v2447
        %v2449 = vpop.f32.mrf.mxu0
        %v2450 = vadd.f32 %v2376, %v2449
        %v2451 = vpop.f32.mrf.mxu0
        %2452 = vdwg.mxu0
        %2453 = vmatprep.subr.mxu0 0.0
        %2454 = vmatpush1.msra.mxu0 0.0
        %2455 = vmatprep.subr.mxu0 0.0
        %2456 = vmatpush1.msra.mxu0 0.0
        %2457 = vmatprep.subr.mxu0 0.0
        %2458 = vmatpush1.msra.mxu0 0.0
        %2459 = vmatprep.subr.mxu0 0.0
        %2460 = vmatpush1.msra.mxu0 0.0
        %2461 = vmatprep.subr.mxu0 0.0
        %2462 = vmatpush1.msra.mxu0 0.0
        %2463 = vmatprep.subr.mxu0 0.0
        %2464 = vmatpush1.msra.mxu0 0.0
        %2465 = vmatprep.subr.mxu0 0.0
        %2466 = vmatpush1.msra.mxu0 0.0
        %2467 = vmatprep.subr.mxu0 0.0
        %2468 = vmatpush1.msra.mxu0 0.0
        %2469 = vmatprep.subr.mxu0 0.0
        %2470 = vmatpush1.msra.mxu0 0.0
        %2471 = vmatprep.subr.mxu0 0.0
        %2472 = vmatpush1.msra.mxu0 0.0
        %2473 = vmatprep.subr.mxu0 0.0
        %2474 = vmatpush1.msra.mxu0 0.0
        %2475 = vmatprep.subr.mxu0 0.0
        %2476 = vmatpush1.msra.mxu0 0.0
        %2477 = vmatprep.subr.mxu0 0.0
        %2478 = vmatpush1.msra.mxu0 0.0
        %2479 = vmatprep.subr.mxu0 0.0
        %2480 = vmatpush1.msra.mxu0 0.0
        %2481 = vmatprep.subr.mxu0 0.0
        %2482 = vmatpush1.msra.mxu0 0.0
        %2483 = vmatprep.subr.mxu0 0.0
        %v2484 = vand.u32 %v1750, 4294901760
        %2485 = vmatpush1.msra.mxu0 %v2484
        %2486 = vmatprep.subr.mxu0 0.0
        %2487 = vmatpush2.msra.mxu0 0.0
        %2488 = vmatprep.subr.mxu0 0.0
        %2489 = vmatpush2.msra.mxu0 0.0
        %2490 = vmatprep.subr.mxu0 0.0
        %2491 = vmatpush2.msra.mxu0 0.0
        %2492 = vmatprep.subr.mxu0 0.0
        %2493 = vmatpush2.msra.mxu0 0.0
        %2494 = vmatprep.subr.mxu0 0.0
        %2495 = vmatpush2.msra.mxu0 0.0
        %2496 = vmatprep.subr.mxu0 0.0
        %2497 = vmatpush2.msra.mxu0 0.0
        %2498 = vmatprep.subr.mxu0 0.0
        %2499 = vmatpush2.msra.mxu0 0.0
        %2500 = vmatprep.subr.mxu0 0.0
        %2501 = vmatpush2.msra.mxu0 0.0
        %2502 = vmatprep.subr.mxu0 0.0
        %2503 = vmatpush2.msra.mxu0 0.0
        %2504 = vmatprep.subr.mxu0 0.0
        %2505 = vmatpush2.msra.mxu0 0.0
        %2506 = vmatprep.subr.mxu0 0.0
        %2507 = vmatpush2.msra.mxu0 0.0
        %2508 = vmatprep.subr.mxu0 0.0
        %2509 = vmatpush2.msra.mxu0 0.0
        %2510 = vmatprep.subr.mxu0 0.0
        %2511 = vmatpush2.msra.mxu0 0.0
        %2512 = vmatprep.subr.mxu0 0.0
        %2513 = vmatpush2.msra.mxu0 0.0
        %2514 = vmatprep.subr.mxu0 0.0
        %2515 = vmatpush2.msra.mxu0 0.0
        %2516 = vmatprep.subr.mxu0 0.0
        %2517 = vmatpush2.msra.mxu0 0.0
        %2518 = vmatprep.mubr.f32.mxu0 0.0
        %v2519 = vand.u32 %v1760, 4294901760
        %v2520 = vsub.f32 %v1760, %v2519
        %v2521 = vand.u32 %v2520, 4294901760
        %2522 = vmatmul.mubr.f32.gmra.mxu0 %v2521
        %v2523 = vpop.f32.mrf.mxu0
        %v2524 = vadd.f32 %v2450, %v2523
        %v2525 = vpop.f32.mrf.mxu0
        %2526 = vdwg.mxu0
        %2527 = vmatprep.subr.mxu0 0.0
        %2528 = vmatpush1.msra.mxu0 0.0
        %2529 = vmatprep.subr.mxu0 0.0
        %2530 = vmatpush1.msra.mxu0 0.0
        %2531 = vmatprep.subr.mxu0 0.0
        %2532 = vmatpush1.msra.mxu0 0.0
        %2533 = vmatprep.subr.mxu0 0.0
        %2534 = vmatpush1.msra.mxu0 0.0
        %2535 = vmatprep.subr.mxu0 0.0
        %2536 = vmatpush1.msra.mxu0 0.0
        %2537 = vmatprep.subr.mxu0 0.0
        %2538 = vmatpush1.msra.mxu0 0.0
        %2539 = vmatprep.subr.mxu0 0.0
        %2540 = vmatpush1.msra.mxu0 0.0
        %2541 = vmatprep.subr.mxu0 0.0
        %2542 = vmatpush1.msra.mxu0 0.0
        %2543 = vmatprep.subr.mxu0 0.0
        %2544 = vmatpush1.msra.mxu0 0.0
        %2545 = vmatprep.subr.mxu0 0.0
        %2546 = vmatpush1.msra.mxu0 0.0
        %2547 = vmatprep.subr.mxu0 0.0
        %2548 = vmatpush1.msra.mxu0 0.0
        %2549 = vmatprep.subr.mxu0 0.0
        %2550 = vmatpush1.msra.mxu0 0.0
        %2551 = vmatprep.subr.mxu0 0.0
        %2552 = vmatpush1.msra.mxu0 0.0
        %2553 = vmatprep.subr.mxu0 0.0
        %2554 = vmatpush1.msra.mxu0 0.0
        %2555 = vmatprep.subr.mxu0 0.0
        %2556 = vmatpush1.msra.mxu0 0.0
        %2557 = vmatprep.subr.mxu0 0.0
        %v2558 = vand.u32 %v1750, 4294901760
        %v2559 = vsub.f32 %v1750, %v2558
        %v2560 = vand.u32 %v2559, 4294901760
        %2561 = vmatpush1.msra.mxu0 %v2560
        %2562 = vmatprep.subr.mxu0 0.0
        %2563 = vmatpush2.msra.mxu0 0.0
        %2564 = vmatprep.subr.mxu0 0.0
        %2565 = vmatpush2.msra.mxu0 0.0
        %2566 = vmatprep.subr.mxu0 0.0
        %2567 = vmatpush2.msra.mxu0 0.0
        %2568 = vmatprep.subr.mxu0 0.0
        %2569 = vmatpush2.msra.mxu0 0.0
        %2570 = vmatprep.subr.mxu0 0.0
        %2571 = vmatpush2.msra.mxu0 0.0
        %2572 = vmatprep.subr.mxu0 0.0
        %2573 = vmatpush2.msra.mxu0 0.0
        %2574 = vmatprep.subr.mxu0 0.0
        %2575 = vmatpush2.msra.mxu0 0.0
        %2576 = vmatprep.subr.mxu0 0.0
        %2577 = vmatpush2.msra.mxu0 0.0
        %2578 = vmatprep.subr.mxu0 0.0
        %2579 = vmatpush2.msra.mxu0 0.0
        %2580 = vmatprep.subr.mxu0 0.0
        %2581 = vmatpush2.msra.mxu0 0.0
        %2582 = vmatprep.subr.mxu0 0.0
        %2583 = vmatpush2.msra.mxu0 0.0
        %2584 = vmatprep.subr.mxu0 0.0
        %2585 = vmatpush2.msra.mxu0 0.0
        %2586 = vmatprep.subr.mxu0 0.0
        %2587 = vmatpush2.msra.mxu0 0.0
        %2588 = vmatprep.subr.mxu0 0.0
        %2589 = vmatpush2.msra.mxu0 0.0
        %2590 = vmatprep.subr.mxu0 0.0
        %2591 = vmatpush2.msra.mxu0 0.0
        %2592 = vmatprep.subr.mxu0 0.0
        %2593 = vmatpush2.msra.mxu0 0.0
        %2594 = vmatprep.mubr.f32.mxu0 0.0
        %v2595 = vand.u32 %v1760, 4294901760
        %2596 = vmatmul.mubr.f32.gmra.mxu0 %v2595
        %v2597 = vpop.f32.mrf.mxu0
        %v2598 = vadd.f32 %v2524, %v2597
        %v2599 = vpop.f32.mrf.mxu0
        %2600 = vdwg.mxu0
        %2601 = vmatprep.subr.mxu0 0.0
        %2602 = vmatpush1.msra.mxu0 0.0
        %2603 = vmatprep.subr.mxu0 0.0
        %2604 = vmatpush1.msra.mxu0 0.0
        %2605 = vmatprep.subr.mxu0 0.0
        %2606 = vmatpush1.msra.mxu0 0.0
        %2607 = vmatprep.subr.mxu0 0.0
        %2608 = vmatpush1.msra.mxu0 0.0
        %2609 = vmatprep.subr.mxu0 0.0
        %2610 = vmatpush1.msra.mxu0 0.0
        %2611 = vmatprep.subr.mxu0 0.0
        %2612 = vmatpush1.msra.mxu0 0.0
        %2613 = vmatprep.subr.mxu0 0.0
        %2614 = vmatpush1.msra.mxu0 0.0
        %2615 = vmatprep.subr.mxu0 0.0
        %2616 = vmatpush1.msra.mxu0 0.0
        %2617 = vmatprep.subr.mxu0 0.0
        %2618 = vmatpush1.msra.mxu0 0.0
        %2619 = vmatprep.subr.mxu0 0.0
        %2620 = vmatpush1.msra.mxu0 0.0
        %2621 = vmatprep.subr.mxu0 0.0
        %2622 = vmatpush1.msra.mxu0 0.0
        %2623 = vmatprep.subr.mxu0 0.0
        %2624 = vmatpush1.msra.mxu0 0.0
        %2625 = vmatprep.subr.mxu0 0.0
        %2626 = vmatpush1.msra.mxu0 0.0
        %2627 = vmatprep.subr.mxu0 0.0
        %2628 = vmatpush1.msra.mxu0 0.0
        %2629 = vmatprep.subr.mxu0 0.0
        %2630 = vmatpush1.msra.mxu0 0.0
        %2631 = vmatprep.subr.mxu0 0.0
        %v2632 = vand.u32 %v1750, 4294901760
        %2633 = vmatpush1.msra.mxu0 %v2632
        %2634 = vmatprep.subr.mxu0 0.0
        %2635 = vmatpush2.msra.mxu0 0.0
        %2636 = vmatprep.subr.mxu0 0.0
        %2637 = vmatpush2.msra.mxu0 0.0
        %2638 = vmatprep.subr.mxu0 0.0
        %2639 = vmatpush2.msra.mxu0 0.0
        %2640 = vmatprep.subr.mxu0 0.0
        %2641 = vmatpush2.msra.mxu0 0.0
        %2642 = vmatprep.subr.mxu0 0.0
        %2643 = vmatpush2.msra.mxu0 0.0
        %2644 = vmatprep.subr.mxu0 0.0
        %2645 = vmatpush2.msra.mxu0 0.0
        %2646 = vmatprep.subr.mxu0 0.0
        %2647 = vmatpush2.msra.mxu0 0.0
        %2648 = vmatprep.subr.mxu0 0.0
        %2649 = vmatpush2.msra.mxu0 0.0
        %2650 = vmatprep.subr.mxu0 0.0
        %2651 = vmatpush2.msra.mxu0 0.0
        %2652 = vmatprep.subr.mxu0 0.0
        %2653 = vmatpush2.msra.mxu0 0.0
        %2654 = vmatprep.subr.mxu0 0.0
        %2655 = vmatpush2.msra.mxu0 0.0
        %2656 = vmatprep.subr.mxu0 0.0
        %2657 = vmatpush2.msra.mxu0 0.0
        %2658 = vmatprep.subr.mxu0 0.0
        %2659 = vmatpush2.msra.mxu0 0.0
        %2660 = vmatprep.subr.mxu0 0.0
        %2661 = vmatpush2.msra.mxu0 0.0
        %2662 = vmatprep.subr.mxu0 0.0
        %2663 = vmatpush2.msra.mxu0 0.0
        %2664 = vmatprep.subr.mxu0 0.0
        %2665 = vmatpush2.msra.mxu0 0.0
        %2666 = vmatprep.mubr.f32.mxu0 0.0
        %v2667 = vand.u32 %v1760, 4294901760
        %2668 = vmatmul.mubr.f32.gmra.mxu0 %v2667
        %v2669 = vpop.f32.mrf.mxu0
        %v2670 = vadd.f32 %v2598, %v2669
        %v2671 = vpop.f32.mrf.mxu0
        %2672 = vdwg.mxu0
        %v2673 = vld [vmem:[%s451] sm:$0xff]
        %v2674 = vld [vmem:[%s451 + $0x8] sm:$0xf]
        %v2677 = vcombine.high %v2673, %v2673
        %2678 = vrot.lane.b32.xlu0 %v2673, 109
        %v2679 = vpop.permute.xlu0 %2678
        %2680 = vrot.lane.b32.xlu0 %v2677, 109
        %v2681 = vpop.permute.xlu0 %2680
        %2682 = vrot.lane.b32.xlu0 %v2674, 109
        %v2683 = vpop.permute.xlu0 %2682
        %v2684 = vsel %vm1543, %v2679, %v2681
        %v2685 = vsel %vm1543, %v2681, %v2683
        %v2689 = vadd.f32 %v2223, %v2684
        %v2690 = vadd.f32 %v2225, %v2685
        %v2691 = vadd.f32 %v2670, %v2683
        %v2694 = vcombine.low %v2689, %v2690
        %2696 = vst [vmem:[%s446] sm:$0xff] %v2694
        %vm2697 = vcmask 257024
        %2698 = vst.msk [vmem:[%s446 + $0x8] sm:$0xf] %vm2697, %v2691
        %s2699 = sand.u32 %s314, 1
        %s2700 = scalar_lea.sflag [#allocation5], %s2699
        %s2701 = sand.u32 %s314, 1
        %s2702 = smul.addr %s2701, 12
        %s2703 = scalar_lea.vmem [#allocation6], %s2702
        // Predicated region
        $region77: #{tpu_custom_call.1} parent=71 // pred_check
          %p2704 = pneg %p324
        $region78: #{tpu_custom_call.1} parent=71 // pred_check_branch
          %2706 = sbr.rel (%p2704) target = $region80
        $region79: #{tpu_custom_call.1} parent=71 // pred_region
          %s2708 = ssub.s32 192, 192
          %2709 = vsyncadd %s2700, %s2708
          %s2710 = smul.addr %s28, 3
          %s2711 = smul.addr %s2710, 64
          %s2712 = scalar_lea.hbm %s13, %s2711
          %s2714 = sshll.u32 %s2703, 4
          %s2715 = int_to_ptr.vmem [resolvable:$true] %s2714
          %2717 = dma.vmem_to_hbm [thread:$0]  %s2715, 192, %s2712, %s2700
        $region80: #{tpu_custom_call.1} parent=71 // pred_fallthru
          _
      $region72: #{tpu_custom_call.1} parent=5 // pred_fallthru
        _
      %p2718 = scmp.le.s32.totalorder 2, %s23
      // Predicated region
      $region81: #{tpu_custom_call.1} parent=5 // pred_check
        %p2719 = pneg %p2718
      $region82: #{tpu_custom_call.1} parent=5 // pred_check_branch
        %2721 = sbr.rel (%p2719) target = $region84
      $region83: #{tpu_custom_call.1} parent=5 // pred_region
        %s2722 = ssub.s32 %s23, 2
        // Predicated region
        $region85: #{tpu_custom_call.1} parent=83 // pred_check
          %p2723 = pneg %p330
        $region86: #{tpu_custom_call.1} parent=83 // pred_check_branch
          %2725 = sbr.rel (%p2723) target = $region88
        $region87: #{tpu_custom_call.1} parent=83 // pred_region
          %s2726 = sand.u32 %s315, 1
          %s2727 = scalar_lea.sflag [#allocation5], %s2726
          %s2728 = sand.u32 %s315, 1
          %s2729 = smul.addr %s2728, 12
          %s2730 = scalar_lea.vmem [#allocation6], %s2729
          %2731 = dma.done %s2727, 192
        $region88: #{tpu_custom_call.1} parent=83 // pred_fallthru
          _
      $region84: #{tpu_custom_call.1} parent=5 // pred_fallthru
        _
    $region6: #{tpu_custom_call.1} parent=1 // loop_footer
      %s27 = sadd.s32 1, %s23
    $region7: #{tpu_custom_call.1} parent=1 // loop_footer_branch
      %22 = sbr.rel target = $region3
    $region8: #{tpu_custom_call.1} parent=1 // loop_exit
      _
    %2732 = vsyncpa [#allocation4], 1
    %s2733 = scalar_lea.sflag [#allocation4], 1
    %2734 = vsyncpa %s2733, 1
    %2735 = vsyncpa [#allocation5], 1
    %s2736 = scalar_lea.sflag [#allocation5], 1
    %2737 = vsyncpa %s2736, 1

</llo_original>
